<compile_context>
chip_gen: v6e
topology: v6e:2x2x1
jax: 0.10.0
libtpu: 0.0.40
codegen_flags: <defaults>
</compile_context>

<pallas_src>
import functools

import numpy as np

import jax
import jax.numpy as jnp
from jax.experimental import pallas as pl
from jax.experimental.pallas import tpu as pltpu


def _round_up(x, m):
    return ((x + m - 1) // m) * m


# ----------------------------------------------------------------------------
# Pallas kernel: fused (backbone 1x1 conv) -> (all anchor heads of the scale)
# ----------------------------------------------------------------------------
def _fused_level_kernel(x_ref, wb_ref, bb_ref, wh_ref, bh_ref, mask_ref,
                        feat_ref, head_ref):
    # Backbone 1x1 conv: bf16 MXU matmul, f32 accumulation, f32 bias.
    feat = jnp.dot(x_ref[...], wb_ref[...], preferred_element_type=jnp.float32)
    feat = feat + bb_ref[...]
    feat_ref[...] = feat

    # Fused anchor heads: one wide (lane-padded) matmul + bias.
    head = jnp.dot(feat.astype(jnp.bfloat16), wh_ref[...],
                   preferred_element_type=jnp.float32)
    head = head + bh_ref[...]

    # Sigmoid on the bbox x,y columns of every anchor head.  mask_ref is a
    # per-column 0/1 f32 vector; broadcast it to the tile shape via an add
    # (same broadcast pattern as the bias) and do an exact select.
    m = mask_ref[...] + jnp.zeros_like(head)
    head_ref[...] = jnp.where(m > 0.5, jax.nn.sigmoid(head), head)


def fused_level(x_flat, wb, bb, wh, bh, sig_mask):
    """x_flat: (M, K) bf16.  wb: (K, Cf) bf16, bb: (1, Cf) f32.
    wh: (Cf, Npad) bf16, bh/sig_mask: (1, Npad) f32.
    Returns (feat (M, Cf) f32, head (M, Npad) f32)."""
    M, K = x_flat.shape
    Cf = wb.shape[1]
    Np = wh.shape[1]
    return pl.pallas_call(
        _fused_level_kernel,
        out_shape=(
            jax.ShapeDtypeStruct((M, Cf), jnp.float32),
            jax.ShapeDtypeStruct((M, Np), jnp.float32),
        ),
        grid_spec=pltpu.PrefetchScalarGridSpec(
            num_scalar_prefetch=0,
            grid=(1,),  # single step: everything fits VMEM, pipelining = overhead
            in_specs=[
                pl.BlockSpec((M, K), lambda i: (0, 0)),
                pl.BlockSpec((K, Cf), lambda i: (0, 0)),
                pl.BlockSpec((1, Cf), lambda i: (0, 0)),
                pl.BlockSpec((Cf, Np), lambda i: (0, 0)),
                pl.BlockSpec((1, Np), lambda i: (0, 0)),
                pl.BlockSpec((1, Np), lambda i: (0, 0)),
            ],
            out_specs=(
                pl.BlockSpec((M, Cf), lambda i: (0, 0)),
                pl.BlockSpec((M, Np), lambda i: (0, 0)),
            ),
        ),
        compiler_params=pltpu.CompilerParams(dimension_semantics=("parallel",)),
    )(x_flat, wb, bb, wh, bh, sig_mask)


# ----------------------------------------------------------------------------
# Model glue (plain JAX, jit-fused): params, pooling, layout plumbing
# ----------------------------------------------------------------------------
def _avgpool2x2_nhwc(x):
    n, h, w, c = x.shape
    return x.reshape(n, h // 2, 2, w // 2, 2, c).mean(axis=(2, 4))


def init_params(key, in_channels, backbone_channels, nclasses, anchors_per_scale):
    """Per level: backbone 1x1 conv + all anchor heads fused/padded along N."""
    n_out = 1 + nclasses + 4  # [score | class logits | bbox x,y,w,h]
    levels = []
    c_in = in_channels
    for scale, anchors in enumerate(anchors_per_scale):
        c_out = backbone_channels[scale]
        key, kw, kb = jax.random.split(key, 3)
        wb = 0.1 * jax.random.normal(kw, (c_in, c_out), jnp.float32)
        bb = 0.01 * jax.random.normal(kb, (c_out,), jnp.float32)

        n_heads = len(anchors)
        n_real = n_heads * n_out
        n_pad = _round_up(n_real, 128)  # lane-dense head output

        whs, bhs = [], []
        for _anchor in anchors:
            key, kw2, kb2 = jax.random.split(key, 3)
            whs.append(0.1 * jax.random.normal(kw2, (c_out, n_out), jnp.float32))
            bhs.append(0.01 * jax.random.normal(kb2, (n_out,), jnp.float32))
        wh = jnp.pad(jnp.concatenate(whs, axis=1), ((0, 0), (0, n_pad - n_real)))
        bh = jnp.pad(jnp.concatenate(bhs, axis=0), (0, n_pad - n_real))

        # 1.0 on the bbox x,y columns of each anchor head, 0.0 elsewhere.
        mask = np.zeros((n_pad,), np.float32)
        for h in range(n_heads):
            s = h * n_out + 1 + nclasses
            mask[s:s + 2] = 1.0

        levels.append({
            "wb": wb.astype(jnp.bfloat16),
            "bb": bb.reshape(1, -1),
            "wh": wh.astype(jnp.bfloat16),
            "bh": bh.reshape(1, -1),
            "sig_mask": jnp.asarray(mask).reshape(1, -1),
        })
        c_in = c_out
    return {"levels": levels}


def forward(params, x_nchw, *, nclasses, heads_per_scale):
    n_out = 1 + nclasses + 4
    # PyTorch input is NCHW; convert once to NHWC for the kernels.
    x = jnp.transpose(x_nchw, (0, 2, 3, 1)).astype(jnp.float32)

    outs = []
    feat = x
    for lvl, n_heads in zip(params["levels"], heads_per_scale):
        feat = _avgpool2x2_nhwc(feat)                      # backbone stand-in pool
        n, h, w, _ = feat.shape
        x_flat = feat.reshape(n * h * w, -1).astype(jnp.bfloat16)

        feat_flat, head_flat = fused_level(
            x_flat, lvl["wb"], lvl["bb"], lvl["wh"], lvl["bh"], lvl["sig_mask"])

        feat = feat_flat.reshape(n, h, w, -1)              # feeds the next level

        # Un-pad, split per anchor head, go back to NCHW (one transpose / scale).
        heads = head_flat[:, :n_heads * n_out].reshape(n, h, w, n_heads, n_out)
        heads = jnp.transpose(heads, (3, 0, 4, 1, 2))      # (heads, N, C, H, W)
        for a in range(n_heads):
            y = heads[a]
            outs.append({
                "scores": y[:, 0:1],
                "labels": y[:, 1:1 + nclasses],
                "bboxes": y[:, 1 + nclasses:1 + nclasses + 4],
            })
    return outs


if __name__ == "__main__":
    nclasses = 4
    img_size = 32
    anchors_per_scale = [
        ((10, 13), (16, 30)),
        ((30, 61), (62, 45)),
        ((116, 90), (156, 198)),
    ]
    backbone_channels = [16, 32, 64]   # one entry per scale
    in_channels = 3
    batch = 2

    key = jax.random.PRNGKey(0)
    key, kx, kp = jax.random.split(key, 3)
    x = jax.random.normal(kx, (batch, in_channels, img_size, img_size), jnp.float32)
    params = init_params(kp, in_channels, backbone_channels, nclasses, anchors_per_scale)

    fwd = jax.jit(functools.partial(
        forward,
        nclasses=nclasses,
        heads_per_scale=tuple(len(a) for a in anchors_per_scale),
    ))
    outs = fwd(params, x)
    outs = jax.block_until_ready(outs)

    # light sanity checks on shapes / sigmoid range / head count & order
    g0 = outs[0]
    assert g0["scores"].shape == (batch, 1, 16, 16)
    assert g0["labels"].shape == (batch, nclasses, 16, 16)
    assert g0["bboxes"].shape == (batch, 4, 16, 16)
    assert outs[-1]["bboxes"].shape == (batch, 4, 4, 4)
    assert float(g0["bboxes"][:, 0:2].min()) >= 0.0
    assert float(g0["bboxes"][:, 0:2].max()) <= 1.0
    assert len(outs) == sum(len(a) for a in anchors_per_scale)

    print("KERNEL_OK")
</pallas_src>

<mosaic_0001>
module attributes {stable_mosaic.version = 11 : i64} {
  func.func @_fused_level_kernel(%arg0: i32, %arg1: memref<512x3xbf16, #tpu.memory_space<vmem>>, %arg2: memref<3x16xbf16, #tpu.memory_space<vmem>>, %arg3: memref<1x16xf32, #tpu.memory_space<vmem>>, %arg4: memref<16x128xbf16, #tpu.memory_space<vmem>>, %arg5: memref<1x128xf32, #tpu.memory_space<vmem>>, %arg6: memref<1x128xf32, #tpu.memory_space<vmem>>, %arg7: memref<512x16xf32, #tpu.memory_space<vmem>>, %arg8: memref<512x128xf32, #tpu.memory_space<vmem>>) attributes {dimension_semantics = [#tpu.dimension_semantics<parallel>], iteration_bounds = array<i64: 1>, scalar_prefetch = 0 : i64, scratch_operands = 0 : i64, tpu.core_type = #tpu.core_type<tc>, window_params = [{pipeline_mode = #tpu.pipeline_mode<synchronous>, transform_indices = @transform_0, window_bounds = array<i64: 512, 3>}, {pipeline_mode = #tpu.pipeline_mode<synchronous>, transform_indices = @transform_1, window_bounds = array<i64: 3, 16>}, {pipeline_mode = #tpu.pipeline_mode<synchronous>, transform_indices = @transform_2, window_bounds = array<i64: 1, 16>}, {pipeline_mode = #tpu.pipeline_mode<synchronous>, transform_indices = @transform_3, window_bounds = array<i64: 16, 128>}, {pipeline_mode = #tpu.pipeline_mode<synchronous>, transform_indices = @transform_4, window_bounds = array<i64: 1, 128>}, {pipeline_mode = #tpu.pipeline_mode<synchronous>, transform_indices = @transform_5, window_bounds = array<i64: 1, 128>}, {pipeline_mode = #tpu.pipeline_mode<synchronous>, transform_indices = @transform_6, window_bounds = array<i64: 512, 16>}, {pipeline_mode = #tpu.pipeline_mode<synchronous>, transform_indices = @transform_7, window_bounds = array<i64: 512, 128>}]} {
    %c0 = arith.constant 0 : index
    %c0_0 = arith.constant 0 : index
    %0 = vector.load %arg1[%c0, %c0_0] : memref<512x3xbf16, #tpu.memory_space<vmem>>, vector<512x3xbf16>
    %c0_1 = arith.constant 0 : index
    %c0_2 = arith.constant 0 : index
    %1 = vector.load %arg2[%c0_1, %c0_2] : memref<3x16xbf16, #tpu.memory_space<vmem>>, vector<3x16xbf16>
    %cst = arith.constant dense<0.000000e+00> : vector<512x16xf32>
    %2 = tpu.matmul %0, %1, %cst {dimension_numbers = #tpu.dot_dimension_numbers<[1], [0], [0], [1], [0, 0, 1, 1], [], []>} : vector<512x3xbf16>, vector<3x16xbf16>, vector<512x16xf32> -> vector<512x16xf32>
    %c0_3 = arith.constant 0 : index
    %c0_4 = arith.constant 0 : index
    %3 = vector.load %arg3[%c0_3, %c0_4] : memref<1x16xf32, #tpu.memory_space<vmem>>, vector<1x16xf32>
    %4 = vector.broadcast %3 : vector<1x16xf32> to vector<512x16xf32>
    %5 = arith.addf %2, %4 : vector<512x16xf32>
    %c0_5 = arith.constant 0 : index
    %c0_6 = arith.constant 0 : index
    %6 = vector.load %arg7[%c0_5, %c0_6] : memref<512x16xf32, #tpu.memory_space<vmem>>, vector<512x16xf32>
    tpu.vector_store %arg7[%c0_5, %c0_6], %5 {strides = array<i32>} : memref<512x16xf32, #tpu.memory_space<vmem>>, vector<512x16xf32>,
    %7 = arith.truncf %5 : vector<512x16xf32> to vector<512x16xbf16>
    %c0_7 = arith.constant 0 : index
    %c0_8 = arith.constant 0 : index
    %8 = vector.load %arg4[%c0_7, %c0_8] : memref<16x128xbf16, #tpu.memory_space<vmem>>, vector<16x128xbf16>
    %cst_9 = arith.constant dense<0.000000e+00> : vector<512x128xf32>
    %9 = tpu.matmul %7, %8, %cst_9 {dimension_numbers = #tpu.dot_dimension_numbers<[1], [0], [0], [1], [0, 0, 1, 1], [], []>} : vector<512x16xbf16>, vector<16x128xbf16>, vector<512x128xf32> -> vector<512x128xf32>
    %c0_10 = arith.constant 0 : index
    %c0_11 = arith.constant 0 : index
    %10 = vector.load %arg5[%c0_10, %c0_11] : memref<1x128xf32, #tpu.memory_space<vmem>>, vector<1x128xf32>
    %11 = vector.broadcast %10 : vector<1x128xf32> to vector<512x128xf32>
    %12 = arith.addf %9, %11 : vector<512x128xf32>
    %c0_12 = arith.constant 0 : index
    %c0_13 = arith.constant 0 : index
    %13 = vector.load %arg6[%c0_12, %c0_13] : memref<1x128xf32, #tpu.memory_space<vmem>>, vector<1x128xf32>
    %cst_14 = arith.constant 0.000000e+00 : f32
    %14 = vector.broadcast %cst_14 : f32 to vector<512x128xf32>
    %15 = vector.broadcast %13 : vector<1x128xf32> to vector<512x128xf32>
    %16 = arith.addf %15, %14 : vector<512x128xf32>
    %cst_15 = arith.constant 5.000000e-01 : f32
    %17 = vector.broadcast %cst_15 : f32 to vector<512x128xf32>
    %18 = arith.cmpf ogt, %16, %17 : vector<512x128xf32>
    %19 = arith.negf %12 : vector<512x128xf32>
    %20 = math.exp %19 : vector<512x128xf32>
    %cst_16 = arith.constant 1.000000e+00 : f32
    %21 = vector.broadcast %cst_16 : f32 to vector<512x128xf32>
    %22 = arith.addf %21, %20 : vector<512x128xf32>
    %23 = arith.divf %21, %22 : vector<512x128xf32>
    %24 = arith.select %18, %23, %12 : vector<512x128xi1>, vector<512x128xf32>
    %c0_17 = arith.constant 0 : index
    %c0_18 = arith.constant 0 : index
    %25 = vector.load %arg8[%c0_17, %c0_18] : memref<512x128xf32, #tpu.memory_space<vmem>>, vector<512x128xf32>
    tpu.vector_store %arg8[%c0_17, %c0_18], %24 {strides = array<i32>} : memref<512x128xf32, #tpu.memory_space<vmem>>, vector<512x128xf32>,
    return
  }
  func.func @transform_0(%arg0: i32) -> (i32, i32) {
    %c0_i32 = arith.constant 0 : i32
    %c0_i32_0 = arith.constant 0 : i32
    %c0_i32_1 = arith.constant 0 : i32
    return %c0_i32, %c0_i32_0 : i32, i32
  }
  func.func @transform_1(%arg0: i32) -> (i32, i32) {
    %c0_i32 = arith.constant 0 : i32
    %c0_i32_0 = arith.constant 0 : i32
    %c0_i32_1 = arith.constant 0 : i32
    return %c0_i32, %c0_i32_0 : i32, i32
  }
  func.func @transform_2(%arg0: i32) -> (i32, i32) {
    %c0_i32 = arith.constant 0 : i32
    %c0_i32_0 = arith.constant 0 : i32
    %c0_i32_1 = arith.constant 0 : i32
    return %c0_i32, %c0_i32_0 : i32, i32
  }
  func.func @transform_3(%arg0: i32) -> (i32, i32) {
    %c0_i32 = arith.constant 0 : i32
    %c0_i32_0 = arith.constant 0 : i32
    %c0_i32_1 = arith.constant 0 : i32
    return %c0_i32, %c0_i32_0 : i32, i32
  }
  func.func @transform_4(%arg0: i32) -> (i32, i32) {
    %c0_i32 = arith.constant 0 : i32
    %c0_i32_0 = arith.constant 0 : i32
    %c0_i32_1 = arith.constant 0 : i32
    return %c0_i32, %c0_i32_0 : i32, i32
  }
  func.func @transform_5(%arg0: i32) -> (i32, i32) {
    %c0_i32 = arith.constant 0 : i32
    %c0_i32_0 = arith.constant 0 : i32
    %c0_i32_1 = arith.constant 0 : i32
    return %c0_i32, %c0_i32_0 : i32, i32
  }
  func.func @transform_6(%arg0: i32) -> (i32, i32) {
    %c0_i32 = arith.constant 0 : i32
    %c0_i32_0 = arith.constant 0 : i32
    %c0_i32_1 = arith.constant 0 : i32
    return %c0_i32, %c0_i32_0 : i32, i32
  }
  func.func @transform_7(%arg0: i32) -> (i32, i32) {
    %c0_i32 = arith.constant 0 : i32
    %c0_i32_0 = arith.constant 0 : i32
    %c0_i32_1 = arith.constant 0 : i32
    return %c0_i32, %c0_i32_0 : i32, i32
  }
}

module attributes {stable_mosaic.version = 11 : i64} {
  func.func @_fused_level_kernel(%arg0: i32, %arg1: memref<128x16xbf16, #tpu.memory_space<vmem>>, %arg2: memref<16x32xbf16, #tpu.memory_space<vmem>>, %arg3: memref<1x32xf32, #tpu.memory_space<vmem>>, %arg4: memref<32x128xbf16, #tpu.memory_space<vmem>>, %arg5: memref<1x128xf32, #tpu.memory_space<vmem>>, %arg6: memref<1x128xf32, #tpu.memory_space<vmem>>, %arg7: memref<128x32xf32, #tpu.memory_space<vmem>>, %arg8: memref<128x128xf32, #tpu.memory_space<vmem>>) attributes {dimension_semantics = [#tpu.dimension_semantics<parallel>], iteration_bounds = array<i64: 1>, scalar_prefetch = 0 : i64, scratch_operands = 0 : i64, tpu.core_type = #tpu.core_type<tc>, window_params = [{pipeline_mode = #tpu.pipeline_mode<synchronous>, transform_indices = @transform_0, window_bounds = array<i64: 128, 16>}, {pipeline_mode = #tpu.pipeline_mode<synchronous>, transform_indices = @transform_1, window_bounds = array<i64: 16, 32>}, {pipeline_mode = #tpu.pipeline_mode<synchronous>, transform_indices = @transform_2, window_bounds = array<i64: 1, 32>}, {pipeline_mode = #tpu.pipeline_mode<synchronous>, transform_indices = @transform_3, window_bounds = array<i64: 32, 128>}, {pipeline_mode = #tpu.pipeline_mode<synchronous>, transform_indices = @transform_4, window_bounds = array<i64: 1, 128>}, {pipeline_mode = #tpu.pipeline_mode<synchronous>, transform_indices = @transform_5, window_bounds = array<i64: 1, 128>}, {pipeline_mode = #tpu.pipeline_mode<synchronous>, transform_indices = @transform_6, window_bounds = array<i64: 128, 32>}, {pipeline_mode = #tpu.pipeline_mode<synchronous>, transform_indices = @transform_7, window_bounds = array<i64: 128, 128>}]} {
    %c0 = arith.constant 0 : index
    %c0_0 = arith.constant 0 : index
    %0 = vector.load %arg1[%c0, %c0_0] : memref<128x16xbf16, #tpu.memory_space<vmem>>, vector<128x16xbf16>
    %c0_1 = arith.constant 0 : index
    %c0_2 = arith.constant 0 : index
    %1 = vector.load %arg2[%c0_1, %c0_2] : memref<16x32xbf16, #tpu.memory_space<vmem>>, vector<16x32xbf16>
    %cst = arith.constant dense<0.000000e+00> : vector<128x32xf32>
    %2 = tpu.matmul %0, %1, %cst {dimension_numbers = #tpu.dot_dimension_numbers<[1], [0], [0], [1], [0, 0, 1, 1], [], []>} : vector<128x16xbf16>, vector<16x32xbf16>, vector<128x32xf32> -> vector<128x32xf32>
    %c0_3 = arith.constant 0 : index
    %c0_4 = arith.constant 0 : index
    %3 = vector.load %arg3[%c0_3, %c0_4] : memref<1x32xf32, #tpu.memory_space<vmem>>, vector<1x32xf32>
    %4 = vector.broadcast %3 : vector<1x32xf32> to vector<128x32xf32>
    %5 = arith.addf %2, %4 : vector<128x32xf32>
    %c0_5 = arith.constant 0 : index
    %c0_6 = arith.constant 0 : index
    %6 = vector.load %arg7[%c0_5, %c0_6] : memref<128x32xf32, #tpu.memory_space<vmem>>, vector<128x32xf32>
    tpu.vector_store %arg7[%c0_5, %c0_6], %5 {strides = array<i32>} : memref<128x32xf32, #tpu.memory_space<vmem>>, vector<128x32xf32>,
    %7 = arith.truncf %5 : vector<128x32xf32> to vector<128x32xbf16>
    %c0_7 = arith.constant 0 : index
    %c0_8 = arith.constant 0 : index
    %8 = vector.load %arg4[%c0_7, %c0_8] : memref<32x128xbf16, #tpu.memory_space<vmem>>, vector<32x128xbf16>
    %cst_9 = arith.constant dense<0.000000e+00> : vector<128x128xf32>
    %9 = tpu.matmul %7, %8, %cst_9 {dimension_numbers = #tpu.dot_dimension_numbers<[1], [0], [0], [1], [0, 0, 1, 1], [], []>} : vector<128x32xbf16>, vector<32x128xbf16>, vector<128x128xf32> -> vector<128x128xf32>
    %c0_10 = arith.constant 0 : index
    %c0_11 = arith.constant 0 : index
    %10 = vector.load %arg5[%c0_10, %c0_11] : memref<1x128xf32, #tpu.memory_space<vmem>>, vector<1x128xf32>
    %11 = vector.broadcast %10 : vector<1x128xf32> to vector<128x128xf32>
    %12 = arith.addf %9, %11 : vector<128x128xf32>
    %c0_12 = arith.constant 0 : index
    %c0_13 = arith.constant 0 : index
    %13 = vector.load %arg6[%c0_12, %c0_13] : memref<1x128xf32, #tpu.memory_space<vmem>>, vector<1x128xf32>
    %cst_14 = arith.constant 0.000000e+00 : f32
    %14 = vector.broadcast %cst_14 : f32 to vector<128x128xf32>
    %15 = vector.broadcast %13 : vector<1x128xf32> to vector<128x128xf32>
    %16 = arith.addf %15, %14 : vector<128x128xf32>
    %cst_15 = arith.constant 5.000000e-01 : f32
    %17 = vector.broadcast %cst_15 : f32 to vector<128x128xf32>
    %18 = arith.cmpf ogt, %16, %17 : vector<128x128xf32>
    %19 = arith.negf %12 : vector<128x128xf32>
    %20 = math.exp %19 : vector<128x128xf32>
    %cst_16 = arith.constant 1.000000e+00 : f32
    %21 = vector.broadcast %cst_16 : f32 to vector<128x128xf32>
    %22 = arith.addf %21, %20 : vector<128x128xf32>
    %23 = arith.divf %21, %22 : vector<128x128xf32>
    %24 = arith.select %18, %23, %12 : vector<128x128xi1>, vector<128x128xf32>
    %c0_17 = arith.constant 0 : index
    %c0_18 = arith.constant 0 : index
    %25 = vector.load %arg8[%c0_17, %c0_18] : memref<128x128xf32, #tpu.memory_space<vmem>>, vector<128x128xf32>
    tpu.vector_store %arg8[%c0_17, %c0_18], %24 {strides = array<i32>} : memref<128x128xf32, #tpu.memory_space<vmem>>, vector<128x128xf32>,
    return
  }
  func.func @transform_0(%arg0: i32) -> (i32, i32) {
    %c0_i32 = arith.constant 0 : i32
    %c0_i32_0 = arith.constant 0 : i32
    %c0_i32_1 = arith.constant 0 : i32
    return %c0_i32, %c0_i32_0 : i32, i32
  }
  func.func @transform_1(%arg0: i32) -> (i32, i32) {
    %c0_i32 = arith.constant 0 : i32
    %c0_i32_0 = arith.constant 0 : i32
    %c0_i32_1 = arith.constant 0 : i32
    return %c0_i32, %c0_i32_0 : i32, i32
  }
  func.func @transform_2(%arg0: i32) -> (i32, i32) {
    %c0_i32 = arith.constant 0 : i32
    %c0_i32_0 = arith.constant 0 : i32
    %c0_i32_1 = arith.constant 0 : i32
    return %c0_i32, %c0_i32_0 : i32, i32
  }
  func.func @transform_3(%arg0: i32) -> (i32, i32) {
    %c0_i32 = arith.constant 0 : i32
    %c0_i32_0 = arith.constant 0 : i32
    %c0_i32_1 = arith.constant 0 : i32
    return %c0_i32, %c0_i32_0 : i32, i32
  }
  func.func @transform_4(%arg0: i32) -> (i32, i32) {
    %c0_i32 = arith.constant 0 : i32
    %c0_i32_0 = arith.constant 0 : i32
    %c0_i32_1 = arith.constant 0 : i32
    return %c0_i32, %c0_i32_0 : i32, i32
  }
  func.func @transform_5(%arg0: i32) -> (i32, i32) {
    %c0_i32 = arith.constant 0 : i32
    %c0_i32_0 = arith.constant 0 : i32
    %c0_i32_1 = arith.constant 0 : i32
    return %c0_i32, %c0_i32_0 : i32, i32
  }
  func.func @transform_6(%arg0: i32) -> (i32, i32) {
    %c0_i32 = arith.constant 0 : i32
    %c0_i32_0 = arith.constant 0 : i32
    %c0_i32_1 = arith.constant 0 : i32
    return %c0_i32, %c0_i32_0 : i32, i32
  }
  func.func @transform_7(%arg0: i32) -> (i32, i32) {
    %c0_i32 = arith.constant 0 : i32
    %c0_i32_0 = arith.constant 0 : i32
    %c0_i32_1 = arith.constant 0 : i32
    return %c0_i32, %c0_i32_0 : i32, i32
  }
}

module attributes {stable_mosaic.version = 11 : i64} {
  func.func @_fused_level_kernel(%arg0: i32, %arg1: memref<32x32xbf16, #tpu.memory_space<vmem>>, %arg2: memref<32x64xbf16, #tpu.memory_space<vmem>>, %arg3: memref<1x64xf32, #tpu.memory_space<vmem>>, %arg4: memref<64x128xbf16, #tpu.memory_space<vmem>>, %arg5: memref<1x128xf32, #tpu.memory_space<vmem>>, %arg6: memref<1x128xf32, #tpu.memory_space<vmem>>, %arg7: memref<32x64xf32, #tpu.memory_space<vmem>>, %arg8: memref<32x128xf32, #tpu.memory_space<vmem>>) attributes {dimension_semantics = [#tpu.dimension_semantics<parallel>], iteration_bounds = array<i64: 1>, scalar_prefetch = 0 : i64, scratch_operands = 0 : i64, tpu.core_type = #tpu.core_type<tc>, window_params = [{pipeline_mode = #tpu.pipeline_mode<synchronous>, transform_indices = @transform_0, window_bounds = array<i64: 32, 32>}, {pipeline_mode = #tpu.pipeline_mode<synchronous>, transform_indices = @transform_1, window_bounds = array<i64: 32, 64>}, {pipeline_mode = #tpu.pipeline_mode<synchronous>, transform_indices = @transform_2, window_bounds = array<i64: 1, 64>}, {pipeline_mode = #tpu.pipeline_mode<synchronous>, transform_indices = @transform_3, window_bounds = array<i64: 64, 128>}, {pipeline_mode = #tpu.pipeline_mode<synchronous>, transform_indices = @transform_4, window_bounds = array<i64: 1, 128>}, {pipeline_mode = #tpu.pipeline_mode<synchronous>, transform_indices = @transform_5, window_bounds = array<i64: 1, 128>}, {pipeline_mode = #tpu.pipeline_mode<synchronous>, transform_indices = @transform_6, window_bounds = array<i64: 32, 64>}, {pipeline_mode = #tpu.pipeline_mode<synchronous>, transform_indices = @transform_7, window_bounds = array<i64: 32, 128>}]} {
    %c0 = arith.constant 0 : index
    %c0_0 = arith.constant 0 : index
    %0 = vector.load %arg1[%c0, %c0_0] : memref<32x32xbf16, #tpu.memory_space<vmem>>, vector<32x32xbf16>
    %c0_1 = arith.constant 0 : index
    %c0_2 = arith.constant 0 : index
    %1 = vector.load %arg2[%c0_1, %c0_2] : memref<32x64xbf16, #tpu.memory_space<vmem>>, vector<32x64xbf16>
    %cst = arith.constant dense<0.000000e+00> : vector<32x64xf32>
    %2 = tpu.matmul %0, %1, %cst {dimension_numbers = #tpu.dot_dimension_numbers<[1], [0], [0], [1], [0, 0, 1, 1], [], []>} : vector<32x32xbf16>, vector<32x64xbf16>, vector<32x64xf32> -> vector<32x64xf32>
    %c0_3 = arith.constant 0 : index
    %c0_4 = arith.constant 0 : index
    %3 = vector.load %arg3[%c0_3, %c0_4] : memref<1x64xf32, #tpu.memory_space<vmem>>, vector<1x64xf32>
    %4 = vector.broadcast %3 : vector<1x64xf32> to vector<32x64xf32>
    %5 = arith.addf %2, %4 : vector<32x64xf32>
    %c0_5 = arith.constant 0 : index
    %c0_6 = arith.constant 0 : index
    %6 = vector.load %arg7[%c0_5, %c0_6] : memref<32x64xf32, #tpu.memory_space<vmem>>, vector<32x64xf32>
    tpu.vector_store %arg7[%c0_5, %c0_6], %5 {strides = array<i32>} : memref<32x64xf32, #tpu.memory_space<vmem>>, vector<32x64xf32>,
    %7 = arith.truncf %5 : vector<32x64xf32> to vector<32x64xbf16>
    %c0_7 = arith.constant 0 : index
    %c0_8 = arith.constant 0 : index
    %8 = vector.load %arg4[%c0_7, %c0_8] : memref<64x128xbf16, #tpu.memory_space<vmem>>, vector<64x128xbf16>
    %cst_9 = arith.constant dense<0.000000e+00> : vector<32x128xf32>
    %9 = tpu.matmul %7, %8, %cst_9 {dimension_numbers = #tpu.dot_dimension_numbers<[1], [0], [0], [1], [0, 0, 1, 1], [], []>} : vector<32x64xbf16>, vector<64x128xbf16>, vector<32x128xf32> -> vector<32x128xf32>
    %c0_10 = arith.constant 0 : index
    %c0_11 = arith.constant 0 : index
    %10 = vector.load %arg5[%c0_10, %c0_11] : memref<1x128xf32, #tpu.memory_space<vmem>>, vector<1x128xf32>
    %11 = vector.broadcast %10 : vector<1x128xf32> to vector<32x128xf32>
    %12 = arith.addf %9, %11 : vector<32x128xf32>
    %c0_12 = arith.constant 0 : index
    %c0_13 = arith.constant 0 : index
    %13 = vector.load %arg6[%c0_12, %c0_13] : memref<1x128xf32, #tpu.memory_space<vmem>>, vector<1x128xf32>
    %cst_14 = arith.constant 0.000000e+00 : f32
    %14 = vector.broadcast %cst_14 : f32 to vector<32x128xf32>
    %15 = vector.broadcast %13 : vector<1x128xf32> to vector<32x128xf32>
    %16 = arith.addf %15, %14 : vector<32x128xf32>
    %cst_15 = arith.constant 5.000000e-01 : f32
    %17 = vector.broadcast %cst_15 : f32 to vector<32x128xf32>
    %18 = arith.cmpf ogt, %16, %17 : vector<32x128xf32>
    %19 = arith.negf %12 : vector<32x128xf32>
    %20 = math.exp %19 : vector<32x128xf32>
    %cst_16 = arith.constant 1.000000e+00 : f32
    %21 = vector.broadcast %cst_16 : f32 to vector<32x128xf32>
    %22 = arith.addf %21, %20 : vector<32x128xf32>
    %23 = arith.divf %21, %22 : vector<32x128xf32>
    %24 = arith.select %18, %23, %12 : vector<32x128xi1>, vector<32x128xf32>
    %c0_17 = arith.constant 0 : index
    %c0_18 = arith.constant 0 : index
    %25 = vector.load %arg8[%c0_17, %c0_18] : memref<32x128xf32, #tpu.memory_space<vmem>>, vector<32x128xf32>
    tpu.vector_store %arg8[%c0_17, %c0_18], %24 {strides = array<i32>} : memref<32x128xf32, #tpu.memory_space<vmem>>, vector<32x128xf32>,
    return
  }
  func.func @transform_0(%arg0: i32) -> (i32, i32) {
    %c0_i32 = arith.constant 0 : i32
    %c0_i32_0 = arith.constant 0 : i32
    %c0_i32_1 = arith.constant 0 : i32
    return %c0_i32, %c0_i32_0 : i32, i32
  }
  func.func @transform_1(%arg0: i32) -> (i32, i32) {
    %c0_i32 = arith.constant 0 : i32
    %c0_i32_0 = arith.constant 0 : i32
    %c0_i32_1 = arith.constant 0 : i32
    return %c0_i32, %c0_i32_0 : i32, i32
  }
  func.func @transform_2(%arg0: i32) -> (i32, i32) {
    %c0_i32 = arith.constant 0 : i32
    %c0_i32_0 = arith.constant 0 : i32
    %c0_i32_1 = arith.constant 0 : i32
    return %c0_i32, %c0_i32_0 : i32, i32
  }
  func.func @transform_3(%arg0: i32) -> (i32, i32) {
    %c0_i32 = arith.constant 0 : i32
    %c0_i32_0 = arith.constant 0 : i32
    %c0_i32_1 = arith.constant 0 : i32
    return %c0_i32, %c0_i32_0 : i32, i32
  }
  func.func @transform_4(%arg0: i32) -> (i32, i32) {
    %c0_i32 = arith.constant 0 : i32
    %c0_i32_0 = arith.constant 0 : i32
    %c0_i32_1 = arith.constant 0 : i32
    return %c0_i32, %c0_i32_0 : i32, i32
  }
  func.func @transform_5(%arg0: i32) -> (i32, i32) {
    %c0_i32 = arith.constant 0 : i32
    %c0_i32_0 = arith.constant 0 : i32
    %c0_i32_1 = arith.constant 0 : i32
    return %c0_i32, %c0_i32_0 : i32, i32
  }
  func.func @transform_6(%arg0: i32) -> (i32, i32) {
    %c0_i32 = arith.constant 0 : i32
    %c0_i32_0 = arith.constant 0 : i32
    %c0_i32_1 = arith.constant 0 : i32
    return %c0_i32, %c0_i32_0 : i32, i32
  }
  func.func @transform_7(%arg0: i32) -> (i32, i32) {
    %c0_i32 = arith.constant 0 : i32
    %c0_i32_0 = arith.constant 0 : i32
    %c0_i32_1 = arith.constant 0 : i32
    return %c0_i32, %c0_i32_0 : i32, i32
  }
}

</mosaic_0001>

<llo_original>
// kernel: forward.3
$region0: #{forward.3}
  #allocation0 [shape = 'u32[]', space=smem, size = 0x4, offset = 0x4, fixed_abs, tag = 'smem constant byte address 0x4 - core index']
  #allocation1 [shape = 'u32[144,128]{1,0:T(1,128)}', space=vmem, size = 0x12000, scoped, tag = 'internal scratch']
  %s0 = inlined_call_operand.vmem [shape: bf16[512,3], index: 0, kind: input, shape index: {}]
  %s1 = inlined_call_operand.vmem [shape: bf16[3,16], index: 1, kind: input, shape index: {}]
  %s2 = inlined_call_operand.vmem [shape: f32[1,16], index: 2, kind: input, shape index: {}]
  %s3 = inlined_call_operand.vmem [shape: bf16[16,128], index: 3, kind: input, shape index: {}]
  %s4 = inlined_call_operand.vmem [shape: f32[1,128], index: 4, kind: input, shape index: {}]
  %s5 = inlined_call_operand.vmem [shape: f32[1,128], index: 5, kind: input, shape index: {}]
  %s6 = inlined_call_operand.vmem [shape: f32[512,16], index: 6, kind: output, shape index: {0}]
  %s7 = inlined_call_operand.vmem [shape: f32[512,128], index: 7, kind: output, shape index: {1}]
  %8 = xla_tuple %s6, %s7
  %s9 = sld [smem:[#allocation0]]
  $region42: #{forward.3} parent=0
    _
  %s11 = ssub.s32 1, %s9
  %s12 = scalar_select 0, %s11, %s9
  // Predicated region
  $region2: #{forward.3} parent=0 // pred_check
    _
  $region3: #{forward.3} parent=0 // pred_check_branch
    %14 = sbr.rel (0) target = $region5
  $region4: #{forward.3} parent=0 // pred_region
    _
  $region5: #{forward.3} parent=0 // pred_fallthru
    _
  // Predicated region
  $region6: #{forward.3} parent=0 // pred_check
    _
  $region7: #{forward.3} parent=0 // pred_check_branch
    %16 = sbr.rel (0) target = $region9
  $region8: #{forward.3} parent=0 // pred_region
    _
  $region9: #{forward.3} parent=0 // pred_fallthru
    _
  // Predicated region
  $region10: #{forward.3} parent=0 // pred_check
    _
  $region11: #{forward.3} parent=0 // pred_check_branch
    %18 = sbr.rel (0) target = $region13
  $region12: #{forward.3} parent=0 // pred_region
    _
  $region13: #{forward.3} parent=0 // pred_fallthru
    _
  // Predicated region
  $region14: #{forward.3} parent=0 // pred_check
    _
  $region15: #{forward.3} parent=0 // pred_check_branch
    %20 = sbr.rel (0) target = $region17
  $region16: #{forward.3} parent=0 // pred_region
    _
  $region17: #{forward.3} parent=0 // pred_fallthru
    _
  // Predicated region
  $region18: #{forward.3} parent=0 // pred_check
    _
  $region19: #{forward.3} parent=0 // pred_check_branch
    %22 = sbr.rel (0) target = $region21
  $region20: #{forward.3} parent=0 // pred_region
    _
  $region21: #{forward.3} parent=0 // pred_fallthru
    _
  // Predicated region
  $region22: #{forward.3} parent=0 // pred_check
    _
  $region23: #{forward.3} parent=0 // pred_check_branch
    %24 = sbr.rel (0) target = $region25
  $region24: #{forward.3} parent=0 // pred_region
    _
  $region25: #{forward.3} parent=0 // pred_fallthru
    _
  %v26 = vld [vmem:[%s0] sm:$0xf]
  %v27 = vld [vmem:[%s0 + $0x4] sm:$0xf]
  %v28 = vld [vmem:[%s0 + $0x8] sm:$0xf]
  %v29 = vld [vmem:[%s0 + $0xc] sm:$0xf]
  %v30 = vld [vmem:[%s0 + $0x10] sm:$0xf]
  %v31 = vld [vmem:[%s0 + $0x14] sm:$0xf]
  %v32 = vld [vmem:[%s0 + $0x18] sm:$0xf]
  %v33 = vld [vmem:[%s0 + $0x1c] sm:$0xf]
  %v34 = vld [vmem:[%s0 + $0x20] sm:$0xf]
  %v35 = vld [vmem:[%s0 + $0x24] sm:$0xf]
  %v36 = vld [vmem:[%s0 + $0x28] sm:$0xf]
  %v37 = vld [vmem:[%s0 + $0x2c] sm:$0xf]
  %v38 = vld [vmem:[%s0 + $0x30] sm:$0xf]
  %v39 = vld [vmem:[%s0 + $0x34] sm:$0xf]
  %v40 = vld [vmem:[%s0 + $0x38] sm:$0xf]
  %v41 = vld [vmem:[%s0 + $0x3c] sm:$0xf]
  %v42 = vld [vmem:[%s0 + $0x40] sm:$0xf]
  %v43 = vld [vmem:[%s0 + $0x44] sm:$0xf]
  %v44 = vld [vmem:[%s0 + $0x48] sm:$0xf]
  %v45 = vld [vmem:[%s0 + $0x4c] sm:$0xf]
  %v46 = vld [vmem:[%s0 + $0x50] sm:$0xf]
  %v47 = vld [vmem:[%s0 + $0x54] sm:$0xf]
  %v48 = vld [vmem:[%s0 + $0x58] sm:$0xf]
  %v49 = vld [vmem:[%s0 + $0x5c] sm:$0xf]
  %v50 = vld [vmem:[%s0 + $0x60] sm:$0xf]
  %v51 = vld [vmem:[%s0 + $0x64] sm:$0xf]
  %v52 = vld [vmem:[%s0 + $0x68] sm:$0xf]
  %v53 = vld [vmem:[%s0 + $0x6c] sm:$0xf]
  %v54 = vld [vmem:[%s0 + $0x70] sm:$0xf]
  %v55 = vld [vmem:[%s0 + $0x74] sm:$0xf]
  %v56 = vld [vmem:[%s0 + $0x78] sm:$0xf]
  %v57 = vld [vmem:[%s0 + $0x7c] sm:$0xf]
  %v58 = vld [vmem:[%s0 + $0x80] sm:$0xf]
  %v59 = vld [vmem:[%s0 + $0x84] sm:$0xf]
  %v60 = vld [vmem:[%s0 + $0x88] sm:$0xf]
  %v61 = vld [vmem:[%s0 + $0x8c] sm:$0xf]
  %v62 = vld [vmem:[%s0 + $0x90] sm:$0xf]
  %v63 = vld [vmem:[%s0 + $0x94] sm:$0xf]
  %v64 = vld [vmem:[%s0 + $0x98] sm:$0xf]
  %v65 = vld [vmem:[%s0 + $0x9c] sm:$0xf]
  %v66 = vld [vmem:[%s0 + $0xa0] sm:$0xf]
  %v67 = vld [vmem:[%s0 + $0xa4] sm:$0xf]
  %v68 = vld [vmem:[%s0 + $0xa8] sm:$0xf]
  %v69 = vld [vmem:[%s0 + $0xac] sm:$0xf]
  %v70 = vld [vmem:[%s0 + $0xb0] sm:$0xf]
  %v71 = vld [vmem:[%s0 + $0xb4] sm:$0xf]
  %v72 = vld [vmem:[%s0 + $0xb8] sm:$0xf]
  %v73 = vld [vmem:[%s0 + $0xbc] sm:$0xf]
  %v74 = vld [vmem:[%s0 + $0xc0] sm:$0xf]
  %v75 = vld [vmem:[%s0 + $0xc4] sm:$0xf]
  %v76 = vld [vmem:[%s0 + $0xc8] sm:$0xf]
  %v77 = vld [vmem:[%s0 + $0xcc] sm:$0xf]
  %v78 = vld [vmem:[%s0 + $0xd0] sm:$0xf]
  %v79 = vld [vmem:[%s0 + $0xd4] sm:$0xf]
  %v80 = vld [vmem:[%s0 + $0xd8] sm:$0xf]
  %v81 = vld [vmem:[%s0 + $0xdc] sm:$0xf]
  %v82 = vld [vmem:[%s0 + $0xe0] sm:$0xf]
  %v83 = vld [vmem:[%s0 + $0xe4] sm:$0xf]
  %v84 = vld [vmem:[%s0 + $0xe8] sm:$0xf]
  %v85 = vld [vmem:[%s0 + $0xec] sm:$0xf]
  %v86 = vld [vmem:[%s0 + $0xf0] sm:$0xf]
  %v87 = vld [vmem:[%s0 + $0xf4] sm:$0xf]
  %v88 = vld [vmem:[%s0 + $0xf8] sm:$0xf]
  %v89 = vld [vmem:[%s0 + $0xfc] sm:$0xf]
  %v90 = vld [vmem:[%s1] sm:$0x3]
  %v91 = vld [vmem:[%s2] sm:$0x1]
  %v93 = vlaneseq
  %v94 = vshrl.u32 %v93, 7
  %v95 = vsub.s32 0, %v94
  %v96 = vrot.slane %v91, %v95
  %v162 = vunpack.c.l.b16 %v26
  %v163 = vunpack.c.l.b16 %v27
  %v164 = vunpack.c.l.b16 %v28
  %v165 = vunpack.c.l.b16 %v29
  %v166 = vunpack.c.l.b16 %v30
  %v167 = vunpack.c.l.b16 %v31
  %v168 = vunpack.c.l.b16 %v32
  %v169 = vunpack.c.l.b16 %v33
  %v170 = vunpack.c.l.b16 %v34
  %v171 = vunpack.c.l.b16 %v35
  %v172 = vunpack.c.l.b16 %v36
  %v173 = vunpack.c.l.b16 %v37
  %v174 = vunpack.c.l.b16 %v38
  %v175 = vunpack.c.l.b16 %v39
  %v176 = vunpack.c.l.b16 %v40
  %v177 = vunpack.c.l.b16 %v41
  %v178 = vunpack.c.l.b16 %v42
  %v179 = vunpack.c.l.b16 %v43
  %v180 = vunpack.c.l.b16 %v44
  %v181 = vunpack.c.l.b16 %v45
  %v182 = vunpack.c.l.b16 %v46
  %v183 = vunpack.c.l.b16 %v47
  %v184 = vunpack.c.l.b16 %v48
  %v185 = vunpack.c.l.b16 %v49
  %v186 = vunpack.c.l.b16 %v50
  %v187 = vunpack.c.l.b16 %v51
  %v188 = vunpack.c.l.b16 %v52
  %v189 = vunpack.c.l.b16 %v53
  %v190 = vunpack.c.l.b16 %v54
  %v191 = vunpack.c.l.b16 %v55
  %v192 = vunpack.c.l.b16 %v56
  %v193 = vunpack.c.l.b16 %v57
  %v194 = vunpack.c.l.b16 %v58
  %v195 = vunpack.c.l.b16 %v59
  %v196 = vunpack.c.l.b16 %v60
  %v197 = vunpack.c.l.b16 %v61
  %v198 = vunpack.c.l.b16 %v62
  %v199 = vunpack.c.l.b16 %v63
  %v200 = vunpack.c.l.b16 %v64
  %v201 = vunpack.c.l.b16 %v65
  %v202 = vunpack.c.l.b16 %v66
  %v203 = vunpack.c.l.b16 %v67
  %v204 = vunpack.c.l.b16 %v68
  %v205 = vunpack.c.l.b16 %v69
  %v206 = vunpack.c.l.b16 %v70
  %v207 = vunpack.c.l.b16 %v71
  %v208 = vunpack.c.l.b16 %v72
  %v209 = vunpack.c.l.b16 %v73
  %v210 = vunpack.c.l.b16 %v74
  %v211 = vunpack.c.l.b16 %v75
  %v212 = vunpack.c.l.b16 %v76
  %v213 = vunpack.c.l.b16 %v77
  %v214 = vunpack.c.l.b16 %v78
  %v215 = vunpack.c.l.b16 %v79
  %v216 = vunpack.c.l.b16 %v80
  %v217 = vunpack.c.l.b16 %v81
  %v218 = vunpack.c.l.b16 %v82
  %v219 = vunpack.c.l.b16 %v83
  %v220 = vunpack.c.l.b16 %v84
  %v221 = vunpack.c.l.b16 %v85
  %v222 = vunpack.c.l.b16 %v86
  %v223 = vunpack.c.l.b16 %v87
  %v224 = vunpack.c.l.b16 %v88
  %v225 = vunpack.c.l.b16 %v89
  %v226 = vpack.c.b16 %v163, %v162
  %v227 = vpack.c.b16 %v165, %v164
  %v228 = vpack.c.b16 %v167, %v166
  %v229 = vpack.c.b16 %v169, %v168
  %v230 = vpack.c.b16 %v171, %v170
  %v231 = vpack.c.b16 %v173, %v172
  %v232 = vpack.c.b16 %v175, %v174
  %v233 = vpack.c.b16 %v177, %v176
  %v234 = vpack.c.b16 %v179, %v178
  %v235 = vpack.c.b16 %v181, %v180
  %v236 = vpack.c.b16 %v183, %v182
  %v237 = vpack.c.b16 %v185, %v184
  %v238 = vpack.c.b16 %v187, %v186
  %v239 = vpack.c.b16 %v189, %v188
  %v240 = vpack.c.b16 %v191, %v190
  %v241 = vpack.c.b16 %v193, %v192
  %v242 = vpack.c.b16 %v195, %v194
  %v243 = vpack.c.b16 %v197, %v196
  %v244 = vpack.c.b16 %v199, %v198
  %v245 = vpack.c.b16 %v201, %v200
  %v246 = vpack.c.b16 %v203, %v202
  %v247 = vpack.c.b16 %v205, %v204
  %v248 = vpack.c.b16 %v207, %v206
  %v249 = vpack.c.b16 %v209, %v208
  %v250 = vpack.c.b16 %v211, %v210
  %v251 = vpack.c.b16 %v213, %v212
  %v252 = vpack.c.b16 %v215, %v214
  %v253 = vpack.c.b16 %v217, %v216
  %v254 = vpack.c.b16 %v219, %v218
  %v255 = vpack.c.b16 %v221, %v220
  %v256 = vpack.c.b16 %v223, %v222
  %v257 = vpack.c.b16 %v225, %v224
  %vm258 = vcmask 23552
  %v260 = vsel %vm258, %v226, 0
  %v263 = vsel %vm258, %v227, 0
  %v266 = vsel %vm258, %v228, 0
  %v269 = vsel %vm258, %v229, 0
  %v272 = vsel %vm258, %v230, 0
  %v275 = vsel %vm258, %v231, 0
  %v278 = vsel %vm258, %v232, 0
  %v281 = vsel %vm258, %v233, 0
  %v284 = vsel %vm258, %v234, 0
  %v287 = vsel %vm258, %v235, 0
  %v290 = vsel %vm258, %v236, 0
  %v293 = vsel %vm258, %v237, 0
  %v296 = vsel %vm258, %v238, 0
  %v299 = vsel %vm258, %v239, 0
  %v302 = vsel %vm258, %v240, 0
  %v305 = vsel %vm258, %v241, 0
  %v308 = vsel %vm258, %v242, 0
  %v311 = vsel %vm258, %v243, 0
  %v314 = vsel %vm258, %v244, 0
  %v317 = vsel %vm258, %v245, 0
  %v320 = vsel %vm258, %v246, 0
  %v323 = vsel %vm258, %v247, 0
  %v326 = vsel %vm258, %v248, 0
  %v329 = vsel %vm258, %v249, 0
  %v332 = vsel %vm258, %v250, 0
  %v335 = vsel %vm258, %v251, 0
  %v338 = vsel %vm258, %v252, 0
  %v341 = vsel %vm258, %v253, 0
  %v344 = vsel %vm258, %v254, 0
  %v347 = vsel %vm258, %v255, 0
  %v350 = vsel %vm258, %v256, 0
  %v353 = vsel %vm258, %v257, 0
  %vm355 = vcmask 1040384
  %vm356 = vcmask 1041408
  %v357 = vsel %vm355, 4294967295, 65535
  %v358 = vsel %vm356, %v357, 0
  %v360 = vand.u32 %v90, %v358
  %362 = vmatprep.subr.bf16.mxu0 0
  %363 = vmatpush1.bf16.msra.mxu0 0
  %364 = vmatprep.subr.bf16.mxu0 0
  %365 = vmatpush1.bf16.msra.mxu0 0
  %366 = vmatprep.subr.bf16.mxu0 0
  %367 = vmatpush1.bf16.msra.mxu0 0
  %368 = vmatprep.subr.bf16.mxu0 0
  %369 = vmatpush1.bf16.msra.mxu0 0
  %370 = vmatprep.subr.bf16.mxu0 0
  %371 = vmatpush1.bf16.msra.mxu0 0
  %372 = vmatprep.subr.bf16.mxu0 0
  %373 = vmatpush1.bf16.msra.mxu0 0
  %374 = vmatprep.subr.bf16.mxu0 0
  %375 = vmatpush1.bf16.msra.mxu0 0
  %376 = vmatprep.subr.bf16.mxu0 0
  %377 = vmatpush1.bf16.msra.mxu0 %v360
  %378 = vmatprep.subr.bf16.mxu0 0
  %379 = vmatpush2.bf16.msra.mxu0 0
  %380 = vmatprep.subr.bf16.mxu0 0
  %381 = vmatpush2.bf16.msra.mxu0 0
  %382 = vmatprep.subr.bf16.mxu0 0
  %383 = vmatpush2.bf16.msra.mxu0 0
  %384 = vmatprep.subr.bf16.mxu0 0
  %385 = vmatpush2.bf16.msra.mxu0 0
  %386 = vmatprep.subr.bf16.mxu0 0
  %387 = vmatpush2.bf16.msra.mxu0 0
  %388 = vmatprep.subr.bf16.mxu0 0
  %389 = vmatpush2.bf16.msra.mxu0 0
  %390 = vmatprep.subr.bf16.mxu0 0
  %391 = vmatpush2.bf16.msra.mxu0 0
  %392 = vmatprep.subr.bf16.mxu0 0
  %393 = vmatpush2.bf16.msra.mxu0 0
  %394 = vmatprep.mubr.bf16.mxu0 0
  %395 = vmatmul.mubr.bf16.gmra.mxu0 %v260
  %v396 = vpop.f32.mrf.mxu0
  %v397 = vadd.f32 %v96, %v396
  %v398 = vpop.f32.mrf.mxu0
  %v399 = vpop.f32.mrf.mxu0
  %v400 = vadd.f32 %v96, %v399
  %v401 = vpop.f32.mrf.mxu0
  %402 = vmatprep.mubr.bf16.mxu0 0
  %403 = vmatmul.mubr.bf16.gmra.mxu0 %v263
  %v404 = vpop.f32.mrf.mxu0
  %v405 = vadd.f32 %v96, %v404
  %v406 = vpop.f32.mrf.mxu0
  %v407 = vpop.f32.mrf.mxu0
  %v408 = vadd.f32 %v96, %v407
  %v409 = vpop.f32.mrf.mxu0
  %410 = vmatprep.mubr.bf16.mxu0 0
  %411 = vmatmul.mubr.bf16.gmra.mxu0 %v266
  %v412 = vpop.f32.mrf.mxu0
  %v413 = vadd.f32 %v96, %v412
  %v414 = vpop.f32.mrf.mxu0
  %v415 = vpop.f32.mrf.mxu0
  %v416 = vadd.f32 %v96, %v415
  %v417 = vpop.f32.mrf.mxu0
  %418 = vmatprep.mubr.bf16.mxu0 0
  %419 = vmatmul.mubr.bf16.gmra.mxu0 %v269
  %v420 = vpop.f32.mrf.mxu0
  %v421 = vadd.f32 %v96, %v420
  %v422 = vpop.f32.mrf.mxu0
  %v423 = vpop.f32.mrf.mxu0
  %v424 = vadd.f32 %v96, %v423
  %v425 = vpop.f32.mrf.mxu0
  %426 = vmatprep.mubr.bf16.mxu0 0
  %427 = vmatmul.mubr.bf16.gmra.mxu0 %v272
  %v428 = vpop.f32.mrf.mxu0
  %v429 = vadd.f32 %v96, %v428
  %v430 = vpop.f32.mrf.mxu0
  %v431 = vpop.f32.mrf.mxu0
  %v432 = vadd.f32 %v96, %v431
  %v433 = vpop.f32.mrf.mxu0
  %434 = vmatprep.mubr.bf16.mxu0 0
  %435 = vmatmul.mubr.bf16.gmra.mxu0 %v275
  %v436 = vpop.f32.mrf.mxu0
  %v437 = vadd.f32 %v96, %v436
  %v438 = vpop.f32.mrf.mxu0
  %v439 = vpop.f32.mrf.mxu0
  %v440 = vadd.f32 %v96, %v439
  %v441 = vpop.f32.mrf.mxu0
  %442 = vmatprep.mubr.bf16.mxu0 0
  %443 = vmatmul.mubr.bf16.gmra.mxu0 %v278
  %v444 = vpop.f32.mrf.mxu0
  %v445 = vadd.f32 %v96, %v444
  %v446 = vpop.f32.mrf.mxu0
  %v447 = vpop.f32.mrf.mxu0
  %v448 = vadd.f32 %v96, %v447
  %v449 = vpop.f32.mrf.mxu0
  %450 = vmatprep.mubr.bf16.mxu0 0
  %451 = vmatmul.mubr.bf16.gmra.mxu0 %v281
  %v452 = vpop.f32.mrf.mxu0
  %v453 = vadd.f32 %v96, %v452
  %v454 = vpop.f32.mrf.mxu0
  %v455 = vpop.f32.mrf.mxu0
  %v456 = vadd.f32 %v96, %v455
  %v457 = vpop.f32.mrf.mxu0
  %458 = vmatprep.mubr.bf16.mxu0 0
  %459 = vmatmul.mubr.bf16.gmra.mxu0 %v284
  %v460 = vpop.f32.mrf.mxu0
  %v461 = vadd.f32 %v96, %v460
  %v462 = vpop.f32.mrf.mxu0
  %v463 = vpop.f32.mrf.mxu0
  %v464 = vadd.f32 %v96, %v463
  %v465 = vpop.f32.mrf.mxu0
  %466 = vmatprep.mubr.bf16.mxu0 0
  %467 = vmatmul.mubr.bf16.gmra.mxu0 %v287
  %v468 = vpop.f32.mrf.mxu0
  %v469 = vadd.f32 %v96, %v468
  %v470 = vpop.f32.mrf.mxu0
  %v471 = vpop.f32.mrf.mxu0
  %v472 = vadd.f32 %v96, %v471
  %v473 = vpop.f32.mrf.mxu0
  %474 = vmatprep.mubr.bf16.mxu0 0
  %475 = vmatmul.mubr.bf16.gmra.mxu0 %v290
  %v476 = vpop.f32.mrf.mxu0
  %v477 = vadd.f32 %v96, %v476
  %v478 = vpop.f32.mrf.mxu0
  %v479 = vpop.f32.mrf.mxu0
  %v480 = vadd.f32 %v96, %v479
  %v481 = vpop.f32.mrf.mxu0
  %482 = vmatprep.mubr.bf16.mxu0 0
  %483 = vmatmul.mubr.bf16.gmra.mxu0 %v293
  %v484 = vpop.f32.mrf.mxu0
  %v485 = vadd.f32 %v96, %v484
  %v486 = vpop.f32.mrf.mxu0
  %v487 = vpop.f32.mrf.mxu0
  %v488 = vadd.f32 %v96, %v487
  %v489 = vpop.f32.mrf.mxu0
  %490 = vmatprep.mubr.bf16.mxu0 0
  %491 = vmatmul.mubr.bf16.gmra.mxu0 %v296
  %v492 = vpop.f32.mrf.mxu0
  %v493 = vadd.f32 %v96, %v492
  %v494 = vpop.f32.mrf.mxu0
  %v495 = vpop.f32.mrf.mxu0
  %v496 = vadd.f32 %v96, %v495
  %v497 = vpop.f32.mrf.mxu0
  %498 = vmatprep.mubr.bf16.mxu0 0
  %499 = vmatmul.mubr.bf16.gmra.mxu0 %v299
  %v500 = vpop.f32.mrf.mxu0
  %v501 = vadd.f32 %v96, %v500
  %v502 = vpop.f32.mrf.mxu0
  %v503 = vpop.f32.mrf.mxu0
  %v504 = vadd.f32 %v96, %v503
  %v505 = vpop.f32.mrf.mxu0
  %506 = vmatprep.mubr.bf16.mxu0 0
  %507 = vmatmul.mubr.bf16.gmra.mxu0 %v302
  %v508 = vpop.f32.mrf.mxu0
  %v509 = vadd.f32 %v96, %v508
  %v510 = vpop.f32.mrf.mxu0
  %v511 = vpop.f32.mrf.mxu0
  %v512 = vadd.f32 %v96, %v511
  %v513 = vpop.f32.mrf.mxu0
  %514 = vmatprep.mubr.bf16.mxu0 0
  %515 = vmatmul.mubr.bf16.gmra.mxu0 %v305
  %v516 = vpop.f32.mrf.mxu0
  %v517 = vadd.f32 %v96, %v516
  %v518 = vpop.f32.mrf.mxu0
  %v519 = vpop.f32.mrf.mxu0
  %v520 = vadd.f32 %v96, %v519
  %v521 = vpop.f32.mrf.mxu0
  %522 = vmatprep.mubr.bf16.mxu0 0
  %523 = vmatmul.mubr.bf16.gmra.mxu0 %v308
  %v524 = vpop.f32.mrf.mxu0
  %v525 = vadd.f32 %v96, %v524
  %v526 = vpop.f32.mrf.mxu0
  %v527 = vpop.f32.mrf.mxu0
  %v528 = vadd.f32 %v96, %v527
  %v529 = vpop.f32.mrf.mxu0
  %530 = vmatprep.mubr.bf16.mxu0 0
  %531 = vmatmul.mubr.bf16.gmra.mxu0 %v311
  %v532 = vpop.f32.mrf.mxu0
  %v533 = vadd.f32 %v96, %v532
  %v534 = vpop.f32.mrf.mxu0
  %v535 = vpop.f32.mrf.mxu0
  %v536 = vadd.f32 %v96, %v535
  %v537 = vpop.f32.mrf.mxu0
  %538 = vmatprep.mubr.bf16.mxu0 0
  %539 = vmatmul.mubr.bf16.gmra.mxu0 %v314
  %v540 = vpop.f32.mrf.mxu0
  %v541 = vadd.f32 %v96, %v540
  %v542 = vpop.f32.mrf.mxu0
  %v543 = vpop.f32.mrf.mxu0
  %v544 = vadd.f32 %v96, %v543
  %v545 = vpop.f32.mrf.mxu0
  %546 = vmatprep.mubr.bf16.mxu0 0
  %547 = vmatmul.mubr.bf16.gmra.mxu0 %v317
  %v548 = vpop.f32.mrf.mxu0
  %v549 = vadd.f32 %v96, %v548
  %v550 = vpop.f32.mrf.mxu0
  %v551 = vpop.f32.mrf.mxu0
  %v552 = vadd.f32 %v96, %v551
  %v553 = vpop.f32.mrf.mxu0
  %554 = vmatprep.mubr.bf16.mxu0 0
  %555 = vmatmul.mubr.bf16.gmra.mxu0 %v320
  %v556 = vpop.f32.mrf.mxu0
  %v557 = vadd.f32 %v96, %v556
  %v558 = vpop.f32.mrf.mxu0
  %v559 = vpop.f32.mrf.mxu0
  %v560 = vadd.f32 %v96, %v559
  %v561 = vpop.f32.mrf.mxu0
  %562 = vmatprep.mubr.bf16.mxu0 0
  %563 = vmatmul.mubr.bf16.gmra.mxu0 %v323
  %v564 = vpop.f32.mrf.mxu0
  %v565 = vadd.f32 %v96, %v564
  %v566 = vpop.f32.mrf.mxu0
  %v567 = vpop.f32.mrf.mxu0
  %v568 = vadd.f32 %v96, %v567
  %v569 = vpop.f32.mrf.mxu0
  %570 = vmatprep.mubr.bf16.mxu0 0
  %571 = vmatmul.mubr.bf16.gmra.mxu0 %v326
  %v572 = vpop.f32.mrf.mxu0
  %v573 = vadd.f32 %v96, %v572
  %v574 = vpop.f32.mrf.mxu0
  %v575 = vpop.f32.mrf.mxu0
  %v576 = vadd.f32 %v96, %v575
  %v577 = vpop.f32.mrf.mxu0
  %578 = vmatprep.mubr.bf16.mxu0 0
  %579 = vmatmul.mubr.bf16.gmra.mxu0 %v329
  %v580 = vpop.f32.mrf.mxu0
  %v581 = vadd.f32 %v96, %v580
  %v582 = vpop.f32.mrf.mxu0
  %v583 = vpop.f32.mrf.mxu0
  %v584 = vadd.f32 %v96, %v583
  %v585 = vpop.f32.mrf.mxu0
  %586 = vmatprep.mubr.bf16.mxu0 0
  %587 = vmatmul.mubr.bf16.gmra.mxu0 %v332
  %v588 = vpop.f32.mrf.mxu0
  %v589 = vadd.f32 %v96, %v588
  %v590 = vpop.f32.mrf.mxu0
  %v591 = vpop.f32.mrf.mxu0
  %v592 = vadd.f32 %v96, %v591
  %v593 = vpop.f32.mrf.mxu0
  %594 = vmatprep.mubr.bf16.mxu0 0
  %595 = vmatmul.mubr.bf16.gmra.mxu0 %v335
  %v596 = vpop.f32.mrf.mxu0
  %v597 = vadd.f32 %v96, %v596
  %v598 = vpop.f32.mrf.mxu0
  %v599 = vpop.f32.mrf.mxu0
  %v600 = vadd.f32 %v96, %v599
  %v601 = vpop.f32.mrf.mxu0
  %602 = vmatprep.mubr.bf16.mxu0 0
  %603 = vmatmul.mubr.bf16.gmra.mxu0 %v338
  %v604 = vpop.f32.mrf.mxu0
  %v605 = vadd.f32 %v96, %v604
  %v606 = vpop.f32.mrf.mxu0
  %v607 = vpop.f32.mrf.mxu0
  %v608 = vadd.f32 %v96, %v607
  %v609 = vpop.f32.mrf.mxu0
  %610 = vmatprep.mubr.bf16.mxu0 0
  %611 = vmatmul.mubr.bf16.gmra.mxu0 %v341
  %v612 = vpop.f32.mrf.mxu0
  %v613 = vadd.f32 %v96, %v612
  %v614 = vpop.f32.mrf.mxu0
  %v615 = vpop.f32.mrf.mxu0
  %v616 = vadd.f32 %v96, %v615
  %v617 = vpop.f32.mrf.mxu0
  %618 = vmatprep.mubr.bf16.mxu0 0
  %619 = vmatmul.mubr.bf16.gmra.mxu0 %v344
  %v620 = vpop.f32.mrf.mxu0
  %v621 = vadd.f32 %v96, %v620
  %v622 = vpop.f32.mrf.mxu0
  %v623 = vpop.f32.mrf.mxu0
  %v624 = vadd.f32 %v96, %v623
  %v625 = vpop.f32.mrf.mxu0
  %626 = vmatprep.mubr.bf16.mxu0 0
  %627 = vmatmul.mubr.bf16.gmra.mxu0 %v347
  %v628 = vpop.f32.mrf.mxu0
  %v629 = vadd.f32 %v96, %v628
  %v630 = vpop.f32.mrf.mxu0
  %v631 = vpop.f32.mrf.mxu0
  %v632 = vadd.f32 %v96, %v631
  %v633 = vpop.f32.mrf.mxu0
  %634 = vmatprep.mubr.bf16.mxu0 0
  %635 = vmatmul.mubr.bf16.gmra.mxu0 %v350
  %v636 = vpop.f32.mrf.mxu0
  %v637 = vadd.f32 %v96, %v636
  %v638 = vpop.f32.mrf.mxu0
  %v639 = vpop.f32.mrf.mxu0
  %v640 = vadd.f32 %v96, %v639
  %v641 = vpop.f32.mrf.mxu0
  %642 = vmatprep.mubr.bf16.mxu0 0
  %643 = vmatmul.mubr.bf16.gmra.mxu0 %v353
  %v644 = vpop.f32.mrf.mxu0
  %v645 = vadd.f32 %v96, %v644
  %v646 = vpop.f32.mrf.mxu0
  %v647 = vpop.f32.mrf.mxu0
  %v648 = vadd.f32 %v96, %v647
  %v649 = vpop.f32.mrf.mxu0
  %650 = vdwg.mxu0
  %vm651 = vcmask 130048
  %652 = vst.msk [vmem:[%s6] sm:$0xff] %vm651, %v397
  %653 = vst.msk [vmem:[%s6 + $0x8] sm:$0xff] %vm651, %v400
  %654 = vst.msk [vmem:[%s6 + $0x10] sm:$0xff] %vm651, %v405
  %655 = vst.msk [vmem:[%s6 + $0x18] sm:$0xff] %vm651, %v408
  %656 = vst.msk [vmem:[%s6 + $0x20] sm:$0xff] %vm651, %v413
  %657 = vst.msk [vmem:[%s6 + $0x28] sm:$0xff] %vm651, %v416
  %658 = vst.msk [vmem:[%s6 + $0x30] sm:$0xff] %vm651, %v421
  %659 = vst.msk [vmem:[%s6 + $0x38] sm:$0xff] %vm651, %v424
  %660 = vst.msk [vmem:[%s6 + $0x40] sm:$0xff] %vm651, %v429
  %661 = vst.msk [vmem:[%s6 + $0x48] sm:$0xff] %vm651, %v432
  %662 = vst.msk [vmem:[%s6 + $0x50] sm:$0xff] %vm651, %v437
  %663 = vst.msk [vmem:[%s6 + $0x58] sm:$0xff] %vm651, %v440
  %664 = vst.msk [vmem:[%s6 + $0x60] sm:$0xff] %vm651, %v445
  %665 = vst.msk [vmem:[%s6 + $0x68] sm:$0xff] %vm651, %v448
  %666 = vst.msk [vmem:[%s6 + $0x70] sm:$0xff] %vm651, %v453
  %667 = vst.msk [vmem:[%s6 + $0x78] sm:$0xff] %vm651, %v456
  %668 = vst.msk [vmem:[%s6 + $0x80] sm:$0xff] %vm651, %v461
  %669 = vst.msk [vmem:[%s6 + $0x88] sm:$0xff] %vm651, %v464
  %670 = vst.msk [vmem:[%s6 + $0x90] sm:$0xff] %vm651, %v469
  %671 = vst.msk [vmem:[%s6 + $0x98] sm:$0xff] %vm651, %v472
  %672 = vst.msk [vmem:[%s6 + $0xa0] sm:$0xff] %vm651, %v477
  %673 = vst.msk [vmem:[%s6 + $0xa8] sm:$0xff] %vm651, %v480
  %674 = vst.msk [vmem:[%s6 + $0xb0] sm:$0xff] %vm651, %v485
  %675 = vst.msk [vmem:[%s6 + $0xb8] sm:$0xff] %vm651, %v488
  %676 = vst.msk [vmem:[%s6 + $0xc0] sm:$0xff] %vm651, %v493
  %677 = vst.msk [vmem:[%s6 + $0xc8] sm:$0xff] %vm651, %v496
  %678 = vst.msk [vmem:[%s6 + $0xd0] sm:$0xff] %vm651, %v501
  %679 = vst.msk [vmem:[%s6 + $0xd8] sm:$0xff] %vm651, %v504
  %680 = vst.msk [vmem:[%s6 + $0xe0] sm:$0xff] %vm651, %v509
  %681 = vst.msk [vmem:[%s6 + $0xe8] sm:$0xff] %vm651, %v512
  %682 = vst.msk [vmem:[%s6 + $0xf0] sm:$0xff] %vm651, %v517
  %683 = vst.msk [vmem:[%s6 + $0xf8] sm:$0xff] %vm651, %v520
  %684 = vst.msk [vmem:[%s6 + $0x100] sm:$0xff] %vm651, %v525
  %685 = vst.msk [vmem:[%s6 + $0x108] sm:$0xff] %vm651, %v528
  %686 = vst.msk [vmem:[%s6 + $0x110] sm:$0xff] %vm651, %v533
  %687 = vst.msk [vmem:[%s6 + $0x118] sm:$0xff] %vm651, %v536
  %688 = vst.msk [vmem:[%s6 + $0x120] sm:$0xff] %vm651, %v541
  %689 = vst.msk [vmem:[%s6 + $0x128] sm:$0xff] %vm651, %v544
  %690 = vst.msk [vmem:[%s6 + $0x130] sm:$0xff] %vm651, %v549
  %691 = vst.msk [vmem:[%s6 + $0x138] sm:$0xff] %vm651, %v552
  %692 = vst.msk [vmem:[%s6 + $0x140] sm:$0xff] %vm651, %v557
  %693 = vst.msk [vmem:[%s6 + $0x148] sm:$0xff] %vm651, %v560
  %694 = vst.msk [vmem:[%s6 + $0x150] sm:$0xff] %vm651, %v565
  %695 = vst.msk [vmem:[%s6 + $0x158] sm:$0xff] %vm651, %v568
  %696 = vst.msk [vmem:[%s6 + $0x160] sm:$0xff] %vm651, %v573
  %697 = vst.msk [vmem:[%s6 + $0x168] sm:$0xff] %vm651, %v576
  %698 = vst.msk [vmem:[%s6 + $0x170] sm:$0xff] %vm651, %v581
  %699 = vst.msk [vmem:[%s6 + $0x178] sm:$0xff] %vm651, %v584
  %700 = vst.msk [vmem:[%s6 + $0x180] sm:$0xff] %vm651, %v589
  %701 = vst.msk [vmem:[%s6 + $0x188] sm:$0xff] %vm651, %v592
  %702 = vst.msk [vmem:[%s6 + $0x190] sm:$0xff] %vm651, %v597
  %703 = vst.msk [vmem:[%s6 + $0x198] sm:$0xff] %vm651, %v600
  %704 = vst.msk [vmem:[%s6 + $0x1a0] sm:$0xff] %vm651, %v605
  %705 = vst.msk [vmem:[%s6 + $0x1a8] sm:$0xff] %vm651, %v608
  %706 = vst.msk [vmem:[%s6 + $0x1b0] sm:$0xff] %vm651, %v613
  %707 = vst.msk [vmem:[%s6 + $0x1b8] sm:$0xff] %vm651, %v616
  %708 = vst.msk [vmem:[%s6 + $0x1c0] sm:$0xff] %vm651, %v621
  %709 = vst.msk [vmem:[%s6 + $0x1c8] sm:$0xff] %vm651, %v624
  %710 = vst.msk [vmem:[%s6 + $0x1d0] sm:$0xff] %vm651, %v629
  %711 = vst.msk [vmem:[%s6 + $0x1d8] sm:$0xff] %vm651, %v632
  %712 = vst.msk [vmem:[%s6 + $0x1e0] sm:$0xff] %vm651, %v637
  %713 = vst.msk [vmem:[%s6 + $0x1e8] sm:$0xff] %vm651, %v640
  %714 = vst.msk [vmem:[%s6 + $0x1f0] sm:$0xff] %vm651, %v645
  %715 = vst.msk [vmem:[%s6 + $0x1f8] sm:$0xff] %vm651, %v648
  %v716 = vpack.c.bf16 %v400, %v397
  %v717 = vpack.c.bf16 %v408, %v405
  %v718 = vpack.c.bf16 %v416, %v413
  %v719 = vpack.c.bf16 %v424, %v421
  %v720 = vpack.c.bf16 %v432, %v429
  %v721 = vpack.c.bf16 %v440, %v437
  %v722 = vpack.c.bf16 %v448, %v445
  %v723 = vpack.c.bf16 %v456, %v453
  %v724 = vpack.c.bf16 %v464, %v461
  %v725 = vpack.c.bf16 %v472, %v469
  %v726 = vpack.c.bf16 %v480, %v477
  %v727 = vpack.c.bf16 %v488, %v485
  %v728 = vpack.c.bf16 %v496, %v493
  %v729 = vpack.c.bf16 %v504, %v501
  %v730 = vpack.c.bf16 %v512, %v509
  %v731 = vpack.c.bf16 %v520, %v517
  %v732 = vpack.c.bf16 %v528, %v525
  %v733 = vpack.c.bf16 %v536, %v533
  %v734 = vpack.c.bf16 %v544, %v541
  %v735 = vpack.c.bf16 %v552, %v549
  %v736 = vpack.c.bf16 %v560, %v557
  %v737 = vpack.c.bf16 %v568, %v565
  %v738 = vpack.c.bf16 %v576, %v573
  %v739 = vpack.c.bf16 %v584, %v581
  %v740 = vpack.c.bf16 %v592, %v589
  %v741 = vpack.c.bf16 %v600, %v597
  %v742 = vpack.c.bf16 %v608, %v605
  %v743 = vpack.c.bf16 %v616, %v613
  %v744 = vpack.c.bf16 %v624, %v621
  %v745 = vpack.c.bf16 %v632, %v629
  %v746 = vpack.c.bf16 %v640, %v637
  %v747 = vpack.c.bf16 %v648, %v645
  %v748 = vld [vmem:[%s3] sm:$0xf]
  %v749 = vld [vmem:[%s3 + $0x4] sm:$0xf]
  %v750 = vld [vmem:[%s4] sm:$0x1]
  %v752 = vlaneseq
  %v753 = vshrl.u32 %v752, 7
  %v754 = vsub.s32 0, %v753
  %v755 = vrot.slane %v750, %v754
  %v759 = vunpack.c.l.b16 %v748
  %v760 = vunpack.c.l.b16 %v749
  %v761 = vpack.c.b16 %v760, %v759
  %v764 = vsel %vm651, %v716, 0
  %v767 = vsel %vm651, %v717, 0
  %v770 = vsel %vm651, %v718, 0
  %v773 = vsel %vm651, %v719, 0
  %v776 = vsel %vm651, %v720, 0
  %v779 = vsel %vm651, %v721, 0
  %v782 = vsel %vm651, %v722, 0
  %v785 = vsel %vm651, %v723, 0
  %v788 = vsel %vm651, %v724, 0
  %v791 = vsel %vm651, %v725, 0
  %v794 = vsel %vm651, %v726, 0
  %v797 = vsel %vm651, %v727, 0
  %v800 = vsel %vm651, %v728, 0
  %v803 = vsel %vm651, %v729, 0
  %v806 = vsel %vm651, %v730, 0
  %v809 = vsel %vm651, %v731, 0
  %v812 = vsel %vm651, %v732, 0
  %v815 = vsel %vm651, %v733, 0
  %v818 = vsel %vm651, %v734, 0
  %v821 = vsel %vm651, %v735, 0
  %v824 = vsel %vm651, %v736, 0
  %v827 = vsel %vm651, %v737, 0
  %v830 = vsel %vm651, %v738, 0
  %v833 = vsel %vm651, %v739, 0
  %v836 = vsel %vm651, %v740, 0
  %v839 = vsel %vm651, %v741, 0
  %v842 = vsel %vm651, %v742, 0
  %v845 = vsel %vm651, %v743, 0
  %v848 = vsel %vm651, %v744, 0
  %v851 = vsel %vm651, %v745, 0
  %v854 = vsel %vm651, %v746, 0
  %v857 = vsel %vm651, %v747, 0
  %859 = vmatprep.subr.bf16.mxu0 0
  %860 = vmatpush1.bf16.msra.mxu0 0
  %861 = vmatprep.subr.bf16.mxu0 0
  %862 = vmatpush1.bf16.msra.mxu0 0
  %863 = vmatprep.subr.bf16.mxu0 0
  %864 = vmatpush1.bf16.msra.mxu0 0
  %865 = vmatprep.subr.bf16.mxu0 0
  %866 = vmatpush1.bf16.msra.mxu0 0
  %867 = vmatprep.subr.bf16.mxu0 0
  %868 = vmatpush1.bf16.msra.mxu0 0
  %869 = vmatprep.subr.bf16.mxu0 0
  %870 = vmatpush1.bf16.msra.mxu0 0
  %871 = vmatprep.subr.bf16.mxu0 0
  %872 = vmatpush1.bf16.msra.mxu0 0
  %873 = vmatprep.subr.bf16.mxu0 0
  %874 = vmatpush1.bf16.msra.mxu0 %v761
  %875 = vmatprep.subr.bf16.mxu0 0
  %876 = vmatpush2.bf16.msra.mxu0 0
  %877 = vmatprep.subr.bf16.mxu0 0
  %878 = vmatpush2.bf16.msra.mxu0 0
  %879 = vmatprep.subr.bf16.mxu0 0
  %880 = vmatpush2.bf16.msra.mxu0 0
  %881 = vmatprep.subr.bf16.mxu0 0
  %882 = vmatpush2.bf16.msra.mxu0 0
  %883 = vmatprep.subr.bf16.mxu0 0
  %884 = vmatpush2.bf16.msra.mxu0 0
  %885 = vmatprep.subr.bf16.mxu0 0
  %886 = vmatpush2.bf16.msra.mxu0 0
  %887 = vmatprep.subr.bf16.mxu0 0
  %888 = vmatpush2.bf16.msra.mxu0 0
  %889 = vmatprep.subr.bf16.mxu0 0
  %890 = vmatpush2.bf16.msra.mxu0 0
  %891 = vmatprep.mubr.bf16.mxu0 0
  %892 = vmatmul.mubr.bf16.gmra.mxu0 %v764
  %v893 = vpop.f32.mrf.mxu0
  %v894 = vadd.f32 %v755, %v893
  %v895 = vpop.f32.mrf.mxu0
  %v896 = vpop.f32.mrf.mxu0
  %v897 = vadd.f32 %v755, %v896
  %v898 = vpop.f32.mrf.mxu0
  %899 = vmatprep.mubr.bf16.mxu0 0
  %900 = vmatmul.mubr.bf16.gmra.mxu0 %v767
  %v901 = vpop.f32.mrf.mxu0
  %v902 = vadd.f32 %v755, %v901
  %v903 = vpop.f32.mrf.mxu0
  %v904 = vpop.f32.mrf.mxu0
  %v905 = vadd.f32 %v755, %v904
  %v906 = vpop.f32.mrf.mxu0
  %907 = vmatprep.mubr.bf16.mxu0 0
  %908 = vmatmul.mubr.bf16.gmra.mxu0 %v770
  %v909 = vpop.f32.mrf.mxu0
  %v910 = vadd.f32 %v755, %v909
  %v911 = vpop.f32.mrf.mxu0
  %v912 = vpop.f32.mrf.mxu0
  %v913 = vadd.f32 %v755, %v912
  %v914 = vpop.f32.mrf.mxu0
  %915 = vmatprep.mubr.bf16.mxu0 0
  %916 = vmatmul.mubr.bf16.gmra.mxu0 %v773
  %v917 = vpop.f32.mrf.mxu0
  %v918 = vadd.f32 %v755, %v917
  %v919 = vpop.f32.mrf.mxu0
  %v920 = vpop.f32.mrf.mxu0
  %v921 = vadd.f32 %v755, %v920
  %v922 = vpop.f32.mrf.mxu0
  %923 = vmatprep.mubr.bf16.mxu0 0
  %924 = vmatmul.mubr.bf16.gmra.mxu0 %v776
  %v925 = vpop.f32.mrf.mxu0
  %v926 = vadd.f32 %v755, %v925
  %v927 = vpop.f32.mrf.mxu0
  %v928 = vpop.f32.mrf.mxu0
  %v929 = vadd.f32 %v755, %v928
  %v930 = vpop.f32.mrf.mxu0
  %931 = vmatprep.mubr.bf16.mxu0 0
  %932 = vmatmul.mubr.bf16.gmra.mxu0 %v779
  %v933 = vpop.f32.mrf.mxu0
  %v934 = vadd.f32 %v755, %v933
  %v935 = vpop.f32.mrf.mxu0
  %v936 = vpop.f32.mrf.mxu0
  %v937 = vadd.f32 %v755, %v936
  %v938 = vpop.f32.mrf.mxu0
  %939 = vmatprep.mubr.bf16.mxu0 0
  %940 = vmatmul.mubr.bf16.gmra.mxu0 %v782
  %v941 = vpop.f32.mrf.mxu0
  %v942 = vadd.f32 %v755, %v941
  %v943 = vpop.f32.mrf.mxu0
  %v944 = vpop.f32.mrf.mxu0
  %v945 = vadd.f32 %v755, %v944
  %v946 = vpop.f32.mrf.mxu0
  %947 = vmatprep.mubr.bf16.mxu0 0
  %948 = vmatmul.mubr.bf16.gmra.mxu0 %v785
  %v949 = vpop.f32.mrf.mxu0
  %v950 = vadd.f32 %v755, %v949
  %v951 = vpop.f32.mrf.mxu0
  %v952 = vpop.f32.mrf.mxu0
  %v953 = vadd.f32 %v755, %v952
  %v954 = vpop.f32.mrf.mxu0
  %955 = vmatprep.mubr.bf16.mxu0 0
  %956 = vmatmul.mubr.bf16.gmra.mxu0 %v788
  %v957 = vpop.f32.mrf.mxu0
  %v958 = vadd.f32 %v755, %v957
  %v959 = vpop.f32.mrf.mxu0
  %v960 = vpop.f32.mrf.mxu0
  %v961 = vadd.f32 %v755, %v960
  %v962 = vpop.f32.mrf.mxu0
  %963 = vmatprep.mubr.bf16.mxu0 0
  %964 = vmatmul.mubr.bf16.gmra.mxu0 %v791
  %v965 = vpop.f32.mrf.mxu0
  %v966 = vadd.f32 %v755, %v965
  %v967 = vpop.f32.mrf.mxu0
  %v968 = vpop.f32.mrf.mxu0
  %v969 = vadd.f32 %v755, %v968
  %v970 = vpop.f32.mrf.mxu0
  %971 = vmatprep.mubr.bf16.mxu0 0
  %972 = vmatmul.mubr.bf16.gmra.mxu0 %v794
  %v973 = vpop.f32.mrf.mxu0
  %v974 = vadd.f32 %v755, %v973
  %v975 = vpop.f32.mrf.mxu0
  %v976 = vpop.f32.mrf.mxu0
  %v977 = vadd.f32 %v755, %v976
  %v978 = vpop.f32.mrf.mxu0
  %979 = vmatprep.mubr.bf16.mxu0 0
  %980 = vmatmul.mubr.bf16.gmra.mxu0 %v797
  %v981 = vpop.f32.mrf.mxu0
  %v982 = vadd.f32 %v755, %v981
  %v983 = vpop.f32.mrf.mxu0
  %v984 = vpop.f32.mrf.mxu0
  %v985 = vadd.f32 %v755, %v984
  %v986 = vpop.f32.mrf.mxu0
  %987 = vmatprep.mubr.bf16.mxu0 0
  %988 = vmatmul.mubr.bf16.gmra.mxu0 %v800
  %v989 = vpop.f32.mrf.mxu0
  %v990 = vadd.f32 %v755, %v989
  %v991 = vpop.f32.mrf.mxu0
  %v992 = vpop.f32.mrf.mxu0
  %v993 = vadd.f32 %v755, %v992
  %v994 = vpop.f32.mrf.mxu0
  %995 = vmatprep.mubr.bf16.mxu0 0
  %996 = vmatmul.mubr.bf16.gmra.mxu0 %v803
  %v997 = vpop.f32.mrf.mxu0
  %v998 = vadd.f32 %v755, %v997
  %v999 = vpop.f32.mrf.mxu0
  %v1000 = vpop.f32.mrf.mxu0
  %v1001 = vadd.f32 %v755, %v1000
  %v1002 = vpop.f32.mrf.mxu0
  %1003 = vmatprep.mubr.bf16.mxu0 0
  %1004 = vmatmul.mubr.bf16.gmra.mxu0 %v806
  %v1005 = vpop.f32.mrf.mxu0
  %v1006 = vadd.f32 %v755, %v1005
  %v1007 = vpop.f32.mrf.mxu0
  %v1008 = vpop.f32.mrf.mxu0
  %v1009 = vadd.f32 %v755, %v1008
  %v1010 = vpop.f32.mrf.mxu0
  %1011 = vmatprep.mubr.bf16.mxu0 0
  %1012 = vmatmul.mubr.bf16.gmra.mxu0 %v809
  %v1013 = vpop.f32.mrf.mxu0
  %v1014 = vadd.f32 %v755, %v1013
  %v1015 = vpop.f32.mrf.mxu0
  %v1016 = vpop.f32.mrf.mxu0
  %v1017 = vadd.f32 %v755, %v1016
  %v1018 = vpop.f32.mrf.mxu0
  %1019 = vmatprep.mubr.bf16.mxu0 0
  %1020 = vmatmul.mubr.bf16.gmra.mxu0 %v812
  %v1021 = vpop.f32.mrf.mxu0
  %v1022 = vadd.f32 %v755, %v1021
  %v1023 = vpop.f32.mrf.mxu0
  %v1024 = vpop.f32.mrf.mxu0
  %v1025 = vadd.f32 %v755, %v1024
  %v1026 = vpop.f32.mrf.mxu0
  %1027 = vmatprep.mubr.bf16.mxu0 0
  %1028 = vmatmul.mubr.bf16.gmra.mxu0 %v815
  %v1029 = vpop.f32.mrf.mxu0
  %v1030 = vadd.f32 %v755, %v1029
  %v1031 = vpop.f32.mrf.mxu0
  %v1032 = vpop.f32.mrf.mxu0
  %v1033 = vadd.f32 %v755, %v1032
  %v1034 = vpop.f32.mrf.mxu0
  %1035 = vmatprep.mubr.bf16.mxu0 0
  %1036 = vmatmul.mubr.bf16.gmra.mxu0 %v818
  %v1037 = vpop.f32.mrf.mxu0
  %v1038 = vadd.f32 %v755, %v1037
  %v1039 = vpop.f32.mrf.mxu0
  %v1040 = vpop.f32.mrf.mxu0
  %v1041 = vadd.f32 %v755, %v1040
  %v1042 = vpop.f32.mrf.mxu0
  %1043 = vmatprep.mubr.bf16.mxu0 0
  %1044 = vmatmul.mubr.bf16.gmra.mxu0 %v821
  %v1045 = vpop.f32.mrf.mxu0
  %v1046 = vadd.f32 %v755, %v1045
  %v1047 = vpop.f32.mrf.mxu0
  %v1048 = vpop.f32.mrf.mxu0
  %v1049 = vadd.f32 %v755, %v1048
  %v1050 = vpop.f32.mrf.mxu0
  %1051 = vmatprep.mubr.bf16.mxu0 0
  %1052 = vmatmul.mubr.bf16.gmra.mxu0 %v824
  %v1053 = vpop.f32.mrf.mxu0
  %v1054 = vadd.f32 %v755, %v1053
  %v1055 = vpop.f32.mrf.mxu0
  %v1056 = vpop.f32.mrf.mxu0
  %v1057 = vadd.f32 %v755, %v1056
  %v1058 = vpop.f32.mrf.mxu0
  %1059 = vmatprep.mubr.bf16.mxu0 0
  %1060 = vmatmul.mubr.bf16.gmra.mxu0 %v827
  %v1061 = vpop.f32.mrf.mxu0
  %v1062 = vadd.f32 %v755, %v1061
  %v1063 = vpop.f32.mrf.mxu0
  %v1064 = vpop.f32.mrf.mxu0
  %v1065 = vadd.f32 %v755, %v1064
  %v1066 = vpop.f32.mrf.mxu0
  %1067 = vmatprep.mubr.bf16.mxu0 0
  %1068 = vmatmul.mubr.bf16.gmra.mxu0 %v830
  %v1069 = vpop.f32.mrf.mxu0
  %v1070 = vadd.f32 %v755, %v1069
  %v1071 = vpop.f32.mrf.mxu0
  %v1072 = vpop.f32.mrf.mxu0
  %v1073 = vadd.f32 %v755, %v1072
  %v1074 = vpop.f32.mrf.mxu0
  %1075 = vmatprep.mubr.bf16.mxu0 0
  %1076 = vmatmul.mubr.bf16.gmra.mxu0 %v833
  %v1077 = vpop.f32.mrf.mxu0
  %v1078 = vadd.f32 %v755, %v1077
  %v1079 = vpop.f32.mrf.mxu0
  %v1080 = vpop.f32.mrf.mxu0
  %v1081 = vadd.f32 %v755, %v1080
  %v1082 = vpop.f32.mrf.mxu0
  %1083 = vmatprep.mubr.bf16.mxu0 0
  %1084 = vmatmul.mubr.bf16.gmra.mxu0 %v836
  %v1085 = vpop.f32.mrf.mxu0
  %v1086 = vadd.f32 %v755, %v1085
  %v1087 = vpop.f32.mrf.mxu0
  %v1088 = vpop.f32.mrf.mxu0
  %v1089 = vadd.f32 %v755, %v1088
  %v1090 = vpop.f32.mrf.mxu0
  %1091 = vmatprep.mubr.bf16.mxu0 0
  %1092 = vmatmul.mubr.bf16.gmra.mxu0 %v839
  %v1093 = vpop.f32.mrf.mxu0
  %v1094 = vadd.f32 %v755, %v1093
  %v1095 = vpop.f32.mrf.mxu0
  %v1096 = vpop.f32.mrf.mxu0
  %v1097 = vadd.f32 %v755, %v1096
  %v1098 = vpop.f32.mrf.mxu0
  %1099 = vmatprep.mubr.bf16.mxu0 0
  %1100 = vmatmul.mubr.bf16.gmra.mxu0 %v842
  %v1101 = vpop.f32.mrf.mxu0
  %v1102 = vadd.f32 %v755, %v1101
  %v1103 = vpop.f32.mrf.mxu0
  %v1104 = vpop.f32.mrf.mxu0
  %v1105 = vadd.f32 %v755, %v1104
  %v1106 = vpop.f32.mrf.mxu0
  %1107 = vmatprep.mubr.bf16.mxu0 0
  %1108 = vmatmul.mubr.bf16.gmra.mxu0 %v845
  %v1109 = vpop.f32.mrf.mxu0
  %v1110 = vadd.f32 %v755, %v1109
  %v1111 = vpop.f32.mrf.mxu0
  %v1112 = vpop.f32.mrf.mxu0
  %v1113 = vadd.f32 %v755, %v1112
  %v1114 = vpop.f32.mrf.mxu0
  %1115 = vmatprep.mubr.bf16.mxu0 0
  %1116 = vmatmul.mubr.bf16.gmra.mxu0 %v848
  %v1117 = vpop.f32.mrf.mxu0
  %v1118 = vadd.f32 %v755, %v1117
  %v1119 = vpop.f32.mrf.mxu0
  %v1120 = vpop.f32.mrf.mxu0
  %v1121 = vadd.f32 %v755, %v1120
  %v1122 = vpop.f32.mrf.mxu0
  %1123 = vmatprep.mubr.bf16.mxu0 0
  %1124 = vmatmul.mubr.bf16.gmra.mxu0 %v851
  %v1125 = vpop.f32.mrf.mxu0
  %v1126 = vadd.f32 %v755, %v1125
  %v1127 = vpop.f32.mrf.mxu0
  %v1128 = vpop.f32.mrf.mxu0
  %v1129 = vadd.f32 %v755, %v1128
  %v1130 = vpop.f32.mrf.mxu0
  %1131 = vmatprep.mubr.bf16.mxu0 0
  %1132 = vmatmul.mubr.bf16.gmra.mxu0 %v854
  %v1133 = vpop.f32.mrf.mxu0
  %v1134 = vadd.f32 %v755, %v1133
  %v1135 = vpop.f32.mrf.mxu0
  %v1136 = vpop.f32.mrf.mxu0
  %v1137 = vadd.f32 %v755, %v1136
  %v1138 = vpop.f32.mrf.mxu0
  %1139 = vmatprep.mubr.bf16.mxu0 0
  %1140 = vmatmul.mubr.bf16.gmra.mxu0 %v857
  %v1141 = vpop.f32.mrf.mxu0
  %v1142 = vadd.f32 %v755, %v1141
  %v1143 = vpop.f32.mrf.mxu0
  %v1144 = vpop.f32.mrf.mxu0
  %v1145 = vadd.f32 %v755, %v1144
  %v1146 = vpop.f32.mrf.mxu0
  %1147 = vdwg.mxu0
  %v1148 = vld [vmem:[%s5] sm:$0x1]
  %v1150 = vlaneseq
  %v1151 = vshrl.u32 %v1150, 7
  %v1152 = vsub.s32 0, %v1151
  %v1153 = vrot.slane %v1148, %v1152
  %v1155 = vadd.f32 %v1153, 0.0
  %vm1156 = vcmp.gt.f32.partialorder %v1155, 0.5
  %v1157 = vxor.u32 %v894, 2147483648
  %v1158 = vxor.u32 %v897, 2147483648
  %v1159 = vxor.u32 %v902, 2147483648
  %v1160 = vxor.u32 %v905, 2147483648
  %v1161 = vxor.u32 %v910, 2147483648
  %v1162 = vxor.u32 %v913, 2147483648
  %v1163 = vxor.u32 %v918, 2147483648
  %v1164 = vxor.u32 %v921, 2147483648
  %v1165 = vxor.u32 %v926, 2147483648
  %v1166 = vxor.u32 %v929, 2147483648
  %v1167 = vxor.u32 %v934, 2147483648
  %v1168 = vxor.u32 %v937, 2147483648
  %v1169 = vxor.u32 %v942, 2147483648
  %v1170 = vxor.u32 %v945, 2147483648
  %v1171 = vxor.u32 %v950, 2147483648
  %v1172 = vxor.u32 %v953, 2147483648
  %v1173 = vxor.u32 %v958, 2147483648
  %v1174 = vxor.u32 %v961, 2147483648
  %v1175 = vxor.u32 %v966, 2147483648
  %v1176 = vxor.u32 %v969, 2147483648
  %v1177 = vxor.u32 %v974, 2147483648
  %v1178 = vxor.u32 %v977, 2147483648
  %v1179 = vxor.u32 %v982, 2147483648
  %v1180 = vxor.u32 %v985, 2147483648
  %v1181 = vxor.u32 %v990, 2147483648
  %v1182 = vxor.u32 %v993, 2147483648
  %v1183 = vxor.u32 %v998, 2147483648
  %v1184 = vxor.u32 %v1001, 2147483648
  %v1185 = vxor.u32 %v1006, 2147483648
  %v1186 = vxor.u32 %v1009, 2147483648
  %v1187 = vxor.u32 %v1014, 2147483648
  %v1188 = vxor.u32 %v1017, 2147483648
  %v1189 = vxor.u32 %v1022, 2147483648
  %v1190 = vxor.u32 %v1025, 2147483648
  %v1191 = vxor.u32 %v1030, 2147483648
  %v1192 = vxor.u32 %v1033, 2147483648
  %v1193 = vxor.u32 %v1038, 2147483648
  %v1194 = vxor.u32 %v1041, 2147483648
  %v1195 = vxor.u32 %v1046, 2147483648
  %v1196 = vxor.u32 %v1049, 2147483648
  %v1197 = vxor.u32 %v1054, 2147483648
  %v1198 = vxor.u32 %v1057, 2147483648
  %v1199 = vxor.u32 %v1062, 2147483648
  %v1200 = vxor.u32 %v1065, 2147483648
  %v1201 = vxor.u32 %v1070, 2147483648
  %v1202 = vxor.u32 %v1073, 2147483648
  %v1203 = vxor.u32 %v1078, 2147483648
  %v1204 = vxor.u32 %v1081, 2147483648
  %v1205 = vxor.u32 %v1086, 2147483648
  %v1206 = vxor.u32 %v1089, 2147483648
  %v1207 = vxor.u32 %v1094, 2147483648
  %v1208 = vxor.u32 %v1097, 2147483648
  %v1209 = vxor.u32 %v1102, 2147483648
  %v1210 = vxor.u32 %v1105, 2147483648
  %v1211 = vxor.u32 %v1110, 2147483648
  %v1212 = vxor.u32 %v1113, 2147483648
  %v1213 = vxor.u32 %v1118, 2147483648
  %v1214 = vxor.u32 %v1121, 2147483648
  %v1215 = vxor.u32 %v1126, 2147483648
  %v1216 = vxor.u32 %v1129, 2147483648
  %v1217 = vxor.u32 %v1134, 2147483648
  %v1218 = vxor.u32 %v1137, 2147483648
  %v1219 = vxor.u32 %v1142, 2147483648
  %v1220 = vxor.u32 %v1145, 2147483648
  %v1221 = vmul.f32 %v1157, 1.442695
  %v1222 = vpow.pop %v1221
  %v1223 = vmul.f32 %v1158, 1.442695
  %v1224 = vpow.pop %v1223
  %v1225 = vmul.f32 %v1159, 1.442695
  %v1226 = vpow.pop %v1225
  %v1227 = vmul.f32 %v1160, 1.442695
  %v1228 = vpow.pop %v1227
  %v1229 = vmul.f32 %v1161, 1.442695
  %v1230 = vpow.pop %v1229
  %v1231 = vmul.f32 %v1162, 1.442695
  %v1232 = vpow.pop %v1231
  %v1233 = vmul.f32 %v1163, 1.442695
  %v1234 = vpow.pop %v1233
  %v1235 = vmul.f32 %v1164, 1.442695
  %v1236 = vpow.pop %v1235
  %v1237 = vmul.f32 %v1165, 1.442695
  %v1238 = vpow.pop %v1237
  %v1239 = vmul.f32 %v1166, 1.442695
  %v1240 = vpow.pop %v1239
  %v1241 = vmul.f32 %v1167, 1.442695
  %v1242 = vpow.pop %v1241
  %v1243 = vmul.f32 %v1168, 1.442695
  %v1244 = vpow.pop %v1243
  %v1245 = vmul.f32 %v1169, 1.442695
  %v1246 = vpow.pop %v1245
  %v1247 = vmul.f32 %v1170, 1.442695
  %v1248 = vpow.pop %v1247
  %v1249 = vmul.f32 %v1171, 1.442695
  %v1250 = vpow.pop %v1249
  %v1251 = vmul.f32 %v1172, 1.442695
  %v1252 = vpow.pop %v1251
  %v1253 = vmul.f32 %v1173, 1.442695
  %v1254 = vpow.pop %v1253
  %v1255 = vmul.f32 %v1174, 1.442695
  %v1256 = vpow.pop %v1255
  %v1257 = vmul.f32 %v1175, 1.442695
  %v1258 = vpow.pop %v1257
  %v1259 = vmul.f32 %v1176, 1.442695
  %v1260 = vpow.pop %v1259
  %v1261 = vmul.f32 %v1177, 1.442695
  %v1262 = vpow.pop %v1261
  %v1263 = vmul.f32 %v1178, 1.442695
  %v1264 = vpow.pop %v1263
  %v1265 = vmul.f32 %v1179, 1.442695
  %v1266 = vpow.pop %v1265
  %v1267 = vmul.f32 %v1180, 1.442695
  %v1268 = vpow.pop %v1267
  %v1269 = vmul.f32 %v1181, 1.442695
  %v1270 = vpow.pop %v1269
  %v1271 = vmul.f32 %v1182, 1.442695
  %v1272 = vpow.pop %v1271
  %v1273 = vmul.f32 %v1183, 1.442695
  %v1274 = vpow.pop %v1273
  %v1275 = vmul.f32 %v1184, 1.442695
  %v1276 = vpow.pop %v1275
  %v1277 = vmul.f32 %v1185, 1.442695
  %v1278 = vpow.pop %v1277
  %v1279 = vmul.f32 %v1186, 1.442695
  %v1280 = vpow.pop %v1279
  %v1281 = vmul.f32 %v1187, 1.442695
  %v1282 = vpow.pop %v1281
  %v1283 = vmul.f32 %v1188, 1.442695
  %v1284 = vpow.pop %v1283
  %v1285 = vmul.f32 %v1189, 1.442695
  %v1286 = vpow.pop %v1285
  %v1287 = vmul.f32 %v1190, 1.442695
  %v1288 = vpow.pop %v1287
  %v1289 = vmul.f32 %v1191, 1.442695
  %v1290 = vpow.pop %v1289
  %v1291 = vmul.f32 %v1192, 1.442695
  %v1292 = vpow.pop %v1291
  %v1293 = vmul.f32 %v1193, 1.442695
  %v1294 = vpow.pop %v1293
  %v1295 = vmul.f32 %v1194, 1.442695
  %v1296 = vpow.pop %v1295
  %v1297 = vmul.f32 %v1195, 1.442695
  %v1298 = vpow.pop %v1297
  %v1299 = vmul.f32 %v1196, 1.442695
  %v1300 = vpow.pop %v1299
  %v1301 = vmul.f32 %v1197, 1.442695
  %v1302 = vpow.pop %v1301
  %v1303 = vmul.f32 %v1198, 1.442695
  %v1304 = vpow.pop %v1303
  %v1305 = vmul.f32 %v1199, 1.442695
  %v1306 = vpow.pop %v1305
  %v1307 = vmul.f32 %v1200, 1.442695
  %v1308 = vpow.pop %v1307
  %v1309 = vmul.f32 %v1201, 1.442695
  %v1310 = vpow.pop %v1309
  %v1311 = vmul.f32 %v1202, 1.442695
  %v1312 = vpow.pop %v1311
  %v1313 = vmul.f32 %v1203, 1.442695
  %v1314 = vpow.pop %v1313
  %v1315 = vmul.f32 %v1204, 1.442695
  %v1316 = vpow.pop %v1315
  %v1317 = vmul.f32 %v1205, 1.442695
  %v1318 = vpow.pop %v1317
  %v1319 = vmul.f32 %v1206, 1.442695
  %v1320 = vpow.pop %v1319
  %v1321 = vmul.f32 %v1207, 1.442695
  %v1322 = vpow.pop %v1321
  %v1323 = vmul.f32 %v1208, 1.442695
  %v1324 = vpow.pop %v1323
  %v1325 = vmul.f32 %v1209, 1.442695
  %v1326 = vpow.pop %v1325
  %v1327 = vmul.f32 %v1210, 1.442695
  %v1328 = vpow.pop %v1327
  %v1329 = vmul.f32 %v1211, 1.442695
  %v1330 = vpow.pop %v1329
  %v1331 = vmul.f32 %v1212, 1.442695
  %v1332 = vpow.pop %v1331
  %v1333 = vmul.f32 %v1213, 1.442695
  %v1334 = vpow.pop %v1333
  %v1335 = vmul.f32 %v1214, 1.442695
  %v1336 = vpow.pop %v1335
  %v1337 = vmul.f32 %v1215, 1.442695
  %v1338 = vpow.pop %v1337
  %v1339 = vmul.f32 %v1216, 1.442695
  %v1340 = vpow.pop %v1339
  %v1341 = vmul.f32 %v1217, 1.442695
  %v1342 = vpow.pop %v1341
  %v1343 = vmul.f32 %v1218, 1.442695
  %v1344 = vpow.pop %v1343
  %v1345 = vmul.f32 %v1219, 1.442695
  %v1346 = vpow.pop %v1345
  %v1347 = vmul.f32 %v1220, 1.442695
  %v1348 = vpow.pop %v1347
  %v1349 = vadd.f32 %v1222, 1.0
  %v1350 = vadd.f32 %v1224, 1.0
  %v1351 = vadd.f32 %v1226, 1.0
  %v1352 = vadd.f32 %v1228, 1.0
  %v1353 = vadd.f32 %v1230, 1.0
  %v1354 = vadd.f32 %v1232, 1.0
  %v1355 = vadd.f32 %v1234, 1.0
  %v1356 = vadd.f32 %v1236, 1.0
  %v1357 = vadd.f32 %v1238, 1.0
  %v1358 = vadd.f32 %v1240, 1.0
  %v1359 = vadd.f32 %v1242, 1.0
  %v1360 = vadd.f32 %v1244, 1.0
  %v1361 = vadd.f32 %v1246, 1.0
  %v1362 = vadd.f32 %v1248, 1.0
  %v1363 = vadd.f32 %v1250, 1.0
  %v1364 = vadd.f32 %v1252, 1.0
  %v1365 = vadd.f32 %v1254, 1.0
  %v1366 = vadd.f32 %v1256, 1.0
  %v1367 = vadd.f32 %v1258, 1.0
  %v1368 = vadd.f32 %v1260, 1.0
  %v1369 = vadd.f32 %v1262, 1.0
  %v1370 = vadd.f32 %v1264, 1.0
  %v1371 = vadd.f32 %v1266, 1.0
  %v1372 = vadd.f32 %v1268, 1.0
  %v1373 = vadd.f32 %v1270, 1.0
  %v1374 = vadd.f32 %v1272, 1.0
  %v1375 = vadd.f32 %v1274, 1.0
  %v1376 = vadd.f32 %v1276, 1.0
  %v1377 = vadd.f32 %v1278, 1.0
  %v1378 = vadd.f32 %v1280, 1.0
  %v1379 = vadd.f32 %v1282, 1.0
  %v1380 = vadd.f32 %v1284, 1.0
  %v1381 = vadd.f32 %v1286, 1.0
  %v1382 = vadd.f32 %v1288, 1.0
  %v1383 = vadd.f32 %v1290, 1.0
  %v1384 = vadd.f32 %v1292, 1.0
  %v1385 = vadd.f32 %v1294, 1.0
  %v1386 = vadd.f32 %v1296, 1.0
  %v1387 = vadd.f32 %v1298, 1.0
  %v1388 = vadd.f32 %v1300, 1.0
  %v1389 = vadd.f32 %v1302, 1.0
  %v1390 = vadd.f32 %v1304, 1.0
  %v1391 = vadd.f32 %v1306, 1.0
  %v1392 = vadd.f32 %v1308, 1.0
  %v1393 = vadd.f32 %v1310, 1.0
  %v1394 = vadd.f32 %v1312, 1.0
  %v1395 = vadd.f32 %v1314, 1.0
  %v1396 = vadd.f32 %v1316, 1.0
  %v1397 = vadd.f32 %v1318, 1.0
  %v1398 = vadd.f32 %v1320, 1.0
  %v1399 = vadd.f32 %v1322, 1.0
  %v1400 = vadd.f32 %v1324, 1.0
  %v1401 = vadd.f32 %v1326, 1.0
  %v1402 = vadd.f32 %v1328, 1.0
  %v1403 = vadd.f32 %v1330, 1.0
  %v1404 = vadd.f32 %v1332, 1.0
  %v1405 = vadd.f32 %v1334, 1.0
  %v1406 = vadd.f32 %v1336, 1.0
  %v1407 = vadd.f32 %v1338, 1.0
  %v1408 = vadd.f32 %v1340, 1.0
  %v1409 = vadd.f32 %v1342, 1.0
  %v1410 = vadd.f32 %v1344, 1.0
  %v1411 = vadd.f32 %v1346, 1.0
  %v1412 = vadd.f32 %v1348, 1.0
  %v1413 = vrcp.pop %v1349
  %v1414 = vmul.f32 1.0, %v1413
  %v1415 = vrcp.pop %v1350
  %v1416 = vmul.f32 1.0, %v1415
  %v1417 = vrcp.pop %v1351
  %v1418 = vmul.f32 1.0, %v1417
  %v1419 = vrcp.pop %v1352
  %v1420 = vmul.f32 1.0, %v1419
  %v1421 = vrcp.pop %v1353
  %v1422 = vmul.f32 1.0, %v1421
  %v1423 = vrcp.pop %v1354
  %v1424 = vmul.f32 1.0, %v1423
  %v1425 = vrcp.pop %v1355
  %v1426 = vmul.f32 1.0, %v1425
  %v1427 = vrcp.pop %v1356
  %v1428 = vmul.f32 1.0, %v1427
  %v1429 = vrcp.pop %v1357
  %v1430 = vmul.f32 1.0, %v1429
  %v1431 = vrcp.pop %v1358
  %v1432 = vmul.f32 1.0, %v1431
  %v1433 = vrcp.pop %v1359
  %v1434 = vmul.f32 1.0, %v1433
  %v1435 = vrcp.pop %v1360
  %v1436 = vmul.f32 1.0, %v1435
  %v1437 = vrcp.pop %v1361
  %v1438 = vmul.f32 1.0, %v1437
  %v1439 = vrcp.pop %v1362
  %v1440 = vmul.f32 1.0, %v1439
  %v1441 = vrcp.pop %v1363
  %v1442 = vmul.f32 1.0, %v1441
  %v1443 = vrcp.pop %v1364
  %v1444 = vmul.f32 1.0, %v1443
  %v1445 = vrcp.pop %v1365
  %v1446 = vmul.f32 1.0, %v1445
  %v1447 = vrcp.pop %v1366
  %v1448 = vmul.f32 1.0, %v1447
  %v1449 = vrcp.pop %v1367
  %v1450 = vmul.f32 1.0, %v1449
  %v1451 = vrcp.pop %v1368
  %v1452 = vmul.f32 1.0, %v1451
  %v1453 = vrcp.pop %v1369
  %v1454 = vmul.f32 1.0, %v1453
  %v1455 = vrcp.pop %v1370
  %v1456 = vmul.f32 1.0, %v1455
  %v1457 = vrcp.pop %v1371
  %v1458 = vmul.f32 1.0, %v1457
  %v1459 = vrcp.pop %v1372
  %v1460 = vmul.f32 1.0, %v1459
  %v1461 = vrcp.pop %v1373
  %v1462 = vmul.f32 1.0, %v1461
  %v1463 = vrcp.pop %v1374
  %v1464 = vmul.f32 1.0, %v1463
  %v1465 = vrcp.pop %v1375
  %v1466 = vmul.f32 1.0, %v1465
  %v1467 = vrcp.pop %v1376
  %v1468 = vmul.f32 1.0, %v1467
  %v1469 = vrcp.pop %v1377
  %v1470 = vmul.f32 1.0, %v1469
  %v1471 = vrcp.pop %v1378
  %v1472 = vmul.f32 1.0, %v1471
  %v1473 = vrcp.pop %v1379
  %v1474 = vmul.f32 1.0, %v1473
  %v1475 = vrcp.pop %v1380
  %v1476 = vmul.f32 1.0, %v1475
  %v1477 = vrcp.pop %v1381
  %v1478 = vmul.f32 1.0, %v1477
  %v1479 = vrcp.pop %v1382
  %v1480 = vmul.f32 1.0, %v1479
  %v1481 = vrcp.pop %v1383
  %v1482 = vmul.f32 1.0, %v1481
  %v1483 = vrcp.pop %v1384
  %v1484 = vmul.f32 1.0, %v1483
  %v1485 = vrcp.pop %v1385
  %v1486 = vmul.f32 1.0, %v1485
  %v1487 = vrcp.pop %v1386
  %v1488 = vmul.f32 1.0, %v1487
  %v1489 = vrcp.pop %v1387
  %v1490 = vmul.f32 1.0, %v1489
  %v1491 = vrcp.pop %v1388
  %v1492 = vmul.f32 1.0, %v1491
  %v1493 = vrcp.pop %v1389
  %v1494 = vmul.f32 1.0, %v1493
  %v1495 = vrcp.pop %v1390
  %v1496 = vmul.f32 1.0, %v1495
  %v1497 = vrcp.pop %v1391
  %v1498 = vmul.f32 1.0, %v1497
  %v1499 = vrcp.pop %v1392
  %v1500 = vmul.f32 1.0, %v1499
  %v1501 = vrcp.pop %v1393
  %v1502 = vmul.f32 1.0, %v1501
  %v1503 = vrcp.pop %v1394
  %v1504 = vmul.f32 1.0, %v1503
  %v1505 = vrcp.pop %v1395
  %v1506 = vmul.f32 1.0, %v1505
  %v1507 = vrcp.pop %v1396
  %v1508 = vmul.f32 1.0, %v1507
  %v1509 = vrcp.pop %v1397
  %v1510 = vmul.f32 1.0, %v1509
  %v1511 = vrcp.pop %v1398
  %v1512 = vmul.f32 1.0, %v1511
  %v1513 = vrcp.pop %v1399
  %v1514 = vmul.f32 1.0, %v1513
  %v1515 = vrcp.pop %v1400
  %v1516 = vmul.f32 1.0, %v1515
  %v1517 = vrcp.pop %v1401
  %v1518 = vmul.f32 1.0, %v1517
  %v1519 = vrcp.pop %v1402
  %v1520 = vmul.f32 1.0, %v1519
  %v1521 = vrcp.pop %v1403
  %v1522 = vmul.f32 1.0, %v1521
  %v1523 = vrcp.pop %v1404
  %v1524 = vmul.f32 1.0, %v1523
  %v1525 = vrcp.pop %v1405
  %v1526 = vmul.f32 1.0, %v1525
  %v1527 = vrcp.pop %v1406
  %v1528 = vmul.f32 1.0, %v1527
  %v1529 = vrcp.pop %v1407
  %v1530 = vmul.f32 1.0, %v1529
  %v1531 = vrcp.pop %v1408
  %v1532 = vmul.f32 1.0, %v1531
  %v1533 = vrcp.pop %v1409
  %v1534 = vmul.f32 1.0, %v1533
  %v1535 = vrcp.pop %v1410
  %v1536 = vmul.f32 1.0, %v1535
  %v1537 = vrcp.pop %v1411
  %v1538 = vmul.f32 1.0, %v1537
  %v1539 = vrcp.pop %v1412
  %v1540 = vmul.f32 1.0, %v1539
  %v1541 = vsel %vm1156, %v1414, %v894
  %v1542 = vsel %vm1156, %v1416, %v897
  %v1543 = vsel %vm1156, %v1418, %v902
  %v1544 = vsel %vm1156, %v1420, %v905
  %v1545 = vsel %vm1156, %v1422, %v910
  %v1546 = vsel %vm1156, %v1424, %v913
  %v1547 = vsel %vm1156, %v1426, %v918
  %v1548 = vsel %vm1156, %v1428, %v921
  %v1549 = vsel %vm1156, %v1430, %v926
  %v1550 = vsel %vm1156, %v1432, %v929
  %v1551 = vsel %vm1156, %v1434, %v934
  %v1552 = vsel %vm1156, %v1436, %v937
  %v1553 = vsel %vm1156, %v1438, %v942
  %v1554 = vsel %vm1156, %v1440, %v945
  %v1555 = vsel %vm1156, %v1442, %v950
  %v1556 = vsel %vm1156, %v1444, %v953
  %v1557 = vsel %vm1156, %v1446, %v958
  %v1558 = vsel %vm1156, %v1448, %v961
  %v1559 = vsel %vm1156, %v1450, %v966
  %v1560 = vsel %vm1156, %v1452, %v969
  %v1561 = vsel %vm1156, %v1454, %v974
  %v1562 = vsel %vm1156, %v1456, %v977
  %v1563 = vsel %vm1156, %v1458, %v982
  %v1564 = vsel %vm1156, %v1460, %v985
  %v1565 = vsel %vm1156, %v1462, %v990
  %v1566 = vsel %vm1156, %v1464, %v993
  %v1567 = vsel %vm1156, %v1466, %v998
  %v1568 = vsel %vm1156, %v1468, %v1001
  %v1569 = vsel %vm1156, %v1470, %v1006
  %v1570 = vsel %vm1156, %v1472, %v1009
  %v1571 = vsel %vm1156, %v1474, %v1014
  %v1572 = vsel %vm1156, %v1476, %v1017
  %v1573 = vsel %vm1156, %v1478, %v1022
  %v1574 = vsel %vm1156, %v1480, %v1025
  %v1575 = vsel %vm1156, %v1482, %v1030
  %v1576 = vsel %vm1156, %v1484, %v1033
  %v1577 = vsel %vm1156, %v1486, %v1038
  %v1578 = vsel %vm1156, %v1488, %v1041
  %v1579 = vsel %vm1156, %v1490, %v1046
  %v1580 = vsel %vm1156, %v1492, %v1049
  %v1581 = vsel %vm1156, %v1494, %v1054
  %v1582 = vsel %vm1156, %v1496, %v1057
  %v1583 = vsel %vm1156, %v1498, %v1062
  %v1584 = vsel %vm1156, %v1500, %v1065
  %v1585 = vsel %vm1156, %v1502, %v1070
  %v1586 = vsel %vm1156, %v1504, %v1073
  %v1587 = vsel %vm1156, %v1506, %v1078
  %v1588 = vsel %vm1156, %v1508, %v1081
  %v1589 = vsel %vm1156, %v1510, %v1086
  %v1590 = vsel %vm1156, %v1512, %v1089
  %v1591 = vsel %vm1156, %v1514, %v1094
  %v1592 = vsel %vm1156, %v1516, %v1097
  %v1593 = vsel %vm1156, %v1518, %v1102
  %v1594 = vsel %vm1156, %v1520, %v1105
  %v1595 = vsel %vm1156, %v1522, %v1110
  %v1596 = vsel %vm1156, %v1524, %v1113
  %v1597 = vsel %vm1156, %v1526, %v1118
  %v1598 = vsel %vm1156, %v1528, %v1121
  %v1599 = vsel %vm1156, %v1530, %v1126
  %v1600 = vsel %vm1156, %v1532, %v1129
  %v1601 = vsel %vm1156, %v1534, %v1134
  %v1602 = vsel %vm1156, %v1536, %v1137
  %v1603 = vsel %vm1156, %v1538, %v1142
  %v1604 = vsel %vm1156, %v1540, %v1145
  %1605 = vst [vmem:[%s7] sm:$0xff] %v1541
  %1606 = vst [vmem:[%s7 + $0x8] sm:$0xff] %v1542
  %1607 = vst [vmem:[%s7 + $0x10] sm:$0xff] %v1543
  %1608 = vst [vmem:[%s7 + $0x18] sm:$0xff] %v1544
  %1609 = vst [vmem:[%s7 + $0x20] sm:$0xff] %v1545
  %1610 = vst [vmem:[%s7 + $0x28] sm:$0xff] %v1546
  %1611 = vst [vmem:[%s7 + $0x30] sm:$0xff] %v1547
  %1612 = vst [vmem:[%s7 + $0x38] sm:$0xff] %v1548
  %1613 = vst [vmem:[%s7 + $0x40] sm:$0xff] %v1549
  %1614 = vst [vmem:[%s7 + $0x48] sm:$0xff] %v1550
  %1615 = vst [vmem:[%s7 + $0x50] sm:$0xff] %v1551
  %1616 = vst [vmem:[%s7 + $0x58] sm:$0xff] %v1552
  %1617 = vst [vmem:[%s7 + $0x60] sm:$0xff] %v1553
  %1618 = vst [vmem:[%s7 + $0x68] sm:$0xff] %v1554
  %1619 = vst [vmem:[%s7 + $0x70] sm:$0xff] %v1555
  %1620 = vst [vmem:[%s7 + $0x78] sm:$0xff] %v1556
  %1621 = vst [vmem:[%s7 + $0x80] sm:$0xff] %v1557
  %1622 = vst [vmem:[%s7 + $0x88] sm:$0xff] %v1558
  %1623 = vst [vmem:[%s7 + $0x90] sm:$0xff] %v1559
  %1624 = vst [vmem:[%s7 + $0x98] sm:$0xff] %v1560
  %1625 = vst [vmem:[%s7 + $0xa0] sm:$0xff] %v1561
  %1626 = vst [vmem:[%s7 + $0xa8] sm:$0xff] %v1562
  %1627 = vst [vmem:[%s7 + $0xb0] sm:$0xff] %v1563
  %1628 = vst [vmem:[%s7 + $0xb8] sm:$0xff] %v1564
  %1629 = vst [vmem:[%s7 + $0xc0] sm:$0xff] %v1565
  %1630 = vst [vmem:[%s7 + $0xc8] sm:$0xff] %v1566
  %1631 = vst [vmem:[%s7 + $0xd0] sm:$0xff] %v1567
  %1632 = vst [vmem:[%s7 + $0xd8] sm:$0xff] %v1568
  %1633 = vst [vmem:[%s7 + $0xe0] sm:$0xff] %v1569
  %1634 = vst [vmem:[%s7 + $0xe8] sm:$0xff] %v1570
  %1635 = vst [vmem:[%s7 + $0xf0] sm:$0xff] %v1571
  %1636 = vst [vmem:[%s7 + $0xf8] sm:$0xff] %v1572
  %1637 = vst [vmem:[%s7 + $0x100] sm:$0xff] %v1573
  %1638 = vst [vmem:[%s7 + $0x108] sm:$0xff] %v1574
  %1639 = vst [vmem:[%s7 + $0x110] sm:$0xff] %v1575
  %1640 = vst [vmem:[%s7 + $0x118] sm:$0xff] %v1576
  %1641 = vst [vmem:[%s7 + $0x120] sm:$0xff] %v1577
  %1642 = vst [vmem:[%s7 + $0x128] sm:$0xff] %v1578
  %1643 = vst [vmem:[%s7 + $0x130] sm:$0xff] %v1579
  %1644 = vst [vmem:[%s7 + $0x138] sm:$0xff] %v1580
  %1645 = vst [vmem:[%s7 + $0x140] sm:$0xff] %v1581
  %1646 = vst [vmem:[%s7 + $0x148] sm:$0xff] %v1582
  %1647 = vst [vmem:[%s7 + $0x150] sm:$0xff] %v1583
  %1648 = vst [vmem:[%s7 + $0x158] sm:$0xff] %v1584
  %1649 = vst [vmem:[%s7 + $0x160] sm:$0xff] %v1585
  %1650 = vst [vmem:[%s7 + $0x168] sm:$0xff] %v1586
  %1651 = vst [vmem:[%s7 + $0x170] sm:$0xff] %v1587
  %1652 = vst [vmem:[%s7 + $0x178] sm:$0xff] %v1588
  %1653 = vst [vmem:[%s7 + $0x180] sm:$0xff] %v1589
  %1654 = vst [vmem:[%s7 + $0x188] sm:$0xff] %v1590
  %1655 = vst [vmem:[%s7 + $0x190] sm:$0xff] %v1591
  %1656 = vst [vmem:[%s7 + $0x198] sm:$0xff] %v1592
  %1657 = vst [vmem:[%s7 + $0x1a0] sm:$0xff] %v1593
  %1658 = vst [vmem:[%s7 + $0x1a8] sm:$0xff] %v1594
  %1659 = vst [vmem:[%s7 + $0x1b0] sm:$0xff] %v1595
  %1660 = vst [vmem:[%s7 + $0x1b8] sm:$0xff] %v1596
  %1661 = vst [vmem:[%s7 + $0x1c0] sm:$0xff] %v1597
  %1662 = vst [vmem:[%s7 + $0x1c8] sm:$0xff] %v1598
  %1663 = vst [vmem:[%s7 + $0x1d0] sm:$0xff] %v1599
  %1664 = vst [vmem:[%s7 + $0x1d8] sm:$0xff] %v1600
  %1665 = vst [vmem:[%s7 + $0x1e0] sm:$0xff] %v1601
  %1666 = vst [vmem:[%s7 + $0x1e8] sm:$0xff] %v1602
  %1667 = vst [vmem:[%s7 + $0x1f0] sm:$0xff] %v1603
  %1668 = vst [vmem:[%s7 + $0x1f8] sm:$0xff] %v1604
  // Predicated region
  $region26: #{forward.3} parent=0 // pred_check
    _
  $region27: #{forward.3} parent=0 // pred_check_branch
    %1670 = sbr.rel (0) target = $region29
  $region28: #{forward.3} parent=0 // pred_region
    _
  $region29: #{forward.3} parent=0 // pred_fallthru
    _
  // Predicated region
  $region30: #{forward.3} parent=0 // pred_check
    _
  $region31: #{forward.3} parent=0 // pred_check_branch
    %1672 = sbr.rel (0) target = $region33
  $region32: #{forward.3} parent=0 // pred_region
    _
  $region33: #{forward.3} parent=0 // pred_fallthru
    _
  // Predicated region
  $region34: #{forward.3} parent=0 // pred_check
    _
  $region35: #{forward.3} parent=0 // pred_check_branch
    %1674 = sbr.rel (0) target = $region37
  $region36: #{forward.3} parent=0 // pred_region
    _
  $region37: #{forward.3} parent=0 // pred_fallthru
    _
  // Predicated region
  $region38: #{forward.3} parent=0 // pred_check
    _
  $region39: #{forward.3} parent=0 // pred_check_branch
    %1676 = sbr.rel (0) target = $region41
  $region40: #{forward.3} parent=0 // pred_region
    _
  $region41: #{forward.3} parent=0 // pred_fallthru
    _

// kernel: forward.4
$region0: #{forward.4}
  #allocation0 [shape = 'u32[]', space=smem, size = 0x4, offset = 0x4, fixed_abs, tag = 'smem constant byte address 0x4 - core index']
  #allocation1 [shape = 'u32[144,128]{1,0:T(1,128)}', space=vmem, size = 0x12000, scoped, tag = 'internal scratch']
  %s0 = inlined_call_operand.vmem [shape: bf16[128,16], index: 0, kind: input, shape index: {}]
  %s1 = inlined_call_operand.vmem [shape: bf16[16,32], index: 1, kind: input, shape index: {}]
  %s2 = inlined_call_operand.vmem [shape: f32[1,32], index: 2, kind: input, shape index: {}]
  %s3 = inlined_call_operand.vmem [shape: bf16[32,128], index: 3, kind: input, shape index: {}]
  %s4 = inlined_call_operand.vmem [shape: f32[1,128], index: 4, kind: input, shape index: {}]
  %s5 = inlined_call_operand.vmem [shape: f32[1,128], index: 5, kind: input, shape index: {}]
  %s6 = inlined_call_operand.vmem [shape: f32[128,32], index: 6, kind: output, shape index: {0}]
  %s7 = inlined_call_operand.vmem [shape: f32[128,128], index: 7, kind: output, shape index: {1}]
  %8 = xla_tuple %s6, %s7
  %s9 = sld [smem:[#allocation0]]
  $region42: #{forward.4} parent=0
    _
  %s11 = ssub.s32 1, %s9
  %s12 = scalar_select 0, %s11, %s9
  // Predicated region
  $region2: #{forward.4} parent=0 // pred_check
    _
  $region3: #{forward.4} parent=0 // pred_check_branch
    %14 = sbr.rel (0) target = $region5
  $region4: #{forward.4} parent=0 // pred_region
    _
  $region5: #{forward.4} parent=0 // pred_fallthru
    _
  // Predicated region
  $region6: #{forward.4} parent=0 // pred_check
    _
  $region7: #{forward.4} parent=0 // pred_check_branch
    %16 = sbr.rel (0) target = $region9
  $region8: #{forward.4} parent=0 // pred_region
    _
  $region9: #{forward.4} parent=0 // pred_fallthru
    _
  // Predicated region
  $region10: #{forward.4} parent=0 // pred_check
    _
  $region11: #{forward.4} parent=0 // pred_check_branch
    %18 = sbr.rel (0) target = $region13
  $region12: #{forward.4} parent=0 // pred_region
    _
  $region13: #{forward.4} parent=0 // pred_fallthru
    _
  // Predicated region
  $region14: #{forward.4} parent=0 // pred_check
    _
  $region15: #{forward.4} parent=0 // pred_check_branch
    %20 = sbr.rel (0) target = $region17
  $region16: #{forward.4} parent=0 // pred_region
    _
  $region17: #{forward.4} parent=0 // pred_fallthru
    _
  // Predicated region
  $region18: #{forward.4} parent=0 // pred_check
    _
  $region19: #{forward.4} parent=0 // pred_check_branch
    %22 = sbr.rel (0) target = $region21
  $region20: #{forward.4} parent=0 // pred_region
    _
  $region21: #{forward.4} parent=0 // pred_fallthru
    _
  // Predicated region
  $region22: #{forward.4} parent=0 // pred_check
    _
  $region23: #{forward.4} parent=0 // pred_check_branch
    %24 = sbr.rel (0) target = $region25
  $region24: #{forward.4} parent=0 // pred_region
    _
  $region25: #{forward.4} parent=0 // pred_fallthru
    _
  %v26 = vld [vmem:[%s0] sm:$0xf]
  %v27 = vld [vmem:[%s0 + $0x4] sm:$0xf]
  %v28 = vld [vmem:[%s0 + $0x8] sm:$0xf]
  %v29 = vld [vmem:[%s0 + $0xc] sm:$0xf]
  %v30 = vld [vmem:[%s0 + $0x10] sm:$0xf]
  %v31 = vld [vmem:[%s0 + $0x14] sm:$0xf]
  %v32 = vld [vmem:[%s0 + $0x18] sm:$0xf]
  %v33 = vld [vmem:[%s0 + $0x1c] sm:$0xf]
  %v34 = vld [vmem:[%s0 + $0x20] sm:$0xf]
  %v35 = vld [vmem:[%s0 + $0x24] sm:$0xf]
  %v36 = vld [vmem:[%s0 + $0x28] sm:$0xf]
  %v37 = vld [vmem:[%s0 + $0x2c] sm:$0xf]
  %v38 = vld [vmem:[%s0 + $0x30] sm:$0xf]
  %v39 = vld [vmem:[%s0 + $0x34] sm:$0xf]
  %v40 = vld [vmem:[%s0 + $0x38] sm:$0xf]
  %v41 = vld [vmem:[%s0 + $0x3c] sm:$0xf]
  %v42 = vld [vmem:[%s1] sm:$0xf]
  %v43 = vld [vmem:[%s1 + $0x4] sm:$0xf]
  %v44 = vld [vmem:[%s2] sm:$0x1]
  %v46 = vlaneseq
  %v47 = vshrl.u32 %v46, 7
  %v48 = vsub.s32 0, %v47
  %v49 = vrot.slane %v44, %v48
  %v67 = vunpack.c.l.b16 %v26
  %v68 = vunpack.c.l.b16 %v27
  %v69 = vunpack.c.l.b16 %v28
  %v70 = vunpack.c.l.b16 %v29
  %v71 = vunpack.c.l.b16 %v30
  %v72 = vunpack.c.l.b16 %v31
  %v73 = vunpack.c.l.b16 %v32
  %v74 = vunpack.c.l.b16 %v33
  %v75 = vunpack.c.l.b16 %v34
  %v76 = vunpack.c.l.b16 %v35
  %v77 = vunpack.c.l.b16 %v36
  %v78 = vunpack.c.l.b16 %v37
  %v79 = vunpack.c.l.b16 %v38
  %v80 = vunpack.c.l.b16 %v39
  %v81 = vunpack.c.l.b16 %v40
  %v82 = vunpack.c.l.b16 %v41
  %v83 = vpack.c.b16 %v68, %v67
  %v84 = vpack.c.b16 %v70, %v69
  %v85 = vpack.c.b16 %v72, %v71
  %v86 = vpack.c.b16 %v74, %v73
  %v87 = vpack.c.b16 %v76, %v75
  %v88 = vpack.c.b16 %v78, %v77
  %v89 = vpack.c.b16 %v80, %v79
  %v90 = vpack.c.b16 %v82, %v81
  %v93 = vunpack.c.l.b16 %v42
  %v94 = vunpack.c.l.b16 %v43
  %v95 = vpack.c.b16 %v94, %v93
  %vm97 = vcmask 130048
  %v99 = vsel %vm97, %v83, 0
  %v102 = vsel %vm97, %v84, 0
  %v105 = vsel %vm97, %v85, 0
  %v108 = vsel %vm97, %v86, 0
  %v111 = vsel %vm97, %v87, 0
  %v114 = vsel %vm97, %v88, 0
  %v117 = vsel %vm97, %v89, 0
  %v120 = vsel %vm97, %v90, 0
  %122 = vmatprep.subr.bf16.mxu0 0
  %123 = vmatpush1.bf16.msra.mxu0 0
  %124 = vmatprep.subr.bf16.mxu0 0
  %125 = vmatpush1.bf16.msra.mxu0 0
  %126 = vmatprep.subr.bf16.mxu0 0
  %127 = vmatpush1.bf16.msra.mxu0 0
  %128 = vmatprep.subr.bf16.mxu0 0
  %129 = vmatpush1.bf16.msra.mxu0 0
  %130 = vmatprep.subr.bf16.mxu0 0
  %131 = vmatpush1.bf16.msra.mxu0 0
  %132 = vmatprep.subr.bf16.mxu0 0
  %133 = vmatpush1.bf16.msra.mxu0 0
  %134 = vmatprep.subr.bf16.mxu0 0
  %135 = vmatpush1.bf16.msra.mxu0 0
  %136 = vmatprep.subr.bf16.mxu0 0
  %137 = vmatpush1.bf16.msra.mxu0 %v95
  %138 = vmatprep.subr.bf16.mxu0 0
  %139 = vmatpush2.bf16.msra.mxu0 0
  %140 = vmatprep.subr.bf16.mxu0 0
  %141 = vmatpush2.bf16.msra.mxu0 0
  %142 = vmatprep.subr.bf16.mxu0 0
  %143 = vmatpush2.bf16.msra.mxu0 0
  %144 = vmatprep.subr.bf16.mxu0 0
  %145 = vmatpush2.bf16.msra.mxu0 0
  %146 = vmatprep.subr.bf16.mxu0 0
  %147 = vmatpush2.bf16.msra.mxu0 0
  %148 = vmatprep.subr.bf16.mxu0 0
  %149 = vmatpush2.bf16.msra.mxu0 0
  %150 = vmatprep.subr.bf16.mxu0 0
  %151 = vmatpush2.bf16.msra.mxu0 0
  %152 = vmatprep.subr.bf16.mxu0 0
  %153 = vmatpush2.bf16.msra.mxu0 0
  %154 = vmatprep.mubr.bf16.mxu0 0
  %155 = vmatmul.mubr.bf16.gmra.mxu0 %v99
  %v156 = vpop.f32.mrf.mxu0
  %v157 = vadd.f32 %v49, %v156
  %v158 = vpop.f32.mrf.mxu0
  %v159 = vpop.f32.mrf.mxu0
  %v160 = vadd.f32 %v49, %v159
  %v161 = vpop.f32.mrf.mxu0
  %162 = vmatprep.mubr.bf16.mxu0 0
  %163 = vmatmul.mubr.bf16.gmra.mxu0 %v102
  %v164 = vpop.f32.mrf.mxu0
  %v165 = vadd.f32 %v49, %v164
  %v166 = vpop.f32.mrf.mxu0
  %v167 = vpop.f32.mrf.mxu0
  %v168 = vadd.f32 %v49, %v167
  %v169 = vpop.f32.mrf.mxu0
  %170 = vmatprep.mubr.bf16.mxu0 0
  %171 = vmatmul.mubr.bf16.gmra.mxu0 %v105
  %v172 = vpop.f32.mrf.mxu0
  %v173 = vadd.f32 %v49, %v172
  %v174 = vpop.f32.mrf.mxu0
  %v175 = vpop.f32.mrf.mxu0
  %v176 = vadd.f32 %v49, %v175
  %v177 = vpop.f32.mrf.mxu0
  %178 = vmatprep.mubr.bf16.mxu0 0
  %179 = vmatmul.mubr.bf16.gmra.mxu0 %v108
  %v180 = vpop.f32.mrf.mxu0
  %v181 = vadd.f32 %v49, %v180
  %v182 = vpop.f32.mrf.mxu0
  %v183 = vpop.f32.mrf.mxu0
  %v184 = vadd.f32 %v49, %v183
  %v185 = vpop.f32.mrf.mxu0
  %186 = vmatprep.mubr.bf16.mxu0 0
  %187 = vmatmul.mubr.bf16.gmra.mxu0 %v111
  %v188 = vpop.f32.mrf.mxu0
  %v189 = vadd.f32 %v49, %v188
  %v190 = vpop.f32.mrf.mxu0
  %v191 = vpop.f32.mrf.mxu0
  %v192 = vadd.f32 %v49, %v191
  %v193 = vpop.f32.mrf.mxu0
  %194 = vmatprep.mubr.bf16.mxu0 0
  %195 = vmatmul.mubr.bf16.gmra.mxu0 %v114
  %v196 = vpop.f32.mrf.mxu0
  %v197 = vadd.f32 %v49, %v196
  %v198 = vpop.f32.mrf.mxu0
  %v199 = vpop.f32.mrf.mxu0
  %v200 = vadd.f32 %v49, %v199
  %v201 = vpop.f32.mrf.mxu0
  %202 = vmatprep.mubr.bf16.mxu0 0
  %203 = vmatmul.mubr.bf16.gmra.mxu0 %v117
  %v204 = vpop.f32.mrf.mxu0
  %v205 = vadd.f32 %v49, %v204
  %v206 = vpop.f32.mrf.mxu0
  %v207 = vpop.f32.mrf.mxu0
  %v208 = vadd.f32 %v49, %v207
  %v209 = vpop.f32.mrf.mxu0
  %210 = vmatprep.mubr.bf16.mxu0 0
  %211 = vmatmul.mubr.bf16.gmra.mxu0 %v120
  %v212 = vpop.f32.mrf.mxu0
  %v213 = vadd.f32 %v49, %v212
  %v214 = vpop.f32.mrf.mxu0
  %v215 = vpop.f32.mrf.mxu0
  %v216 = vadd.f32 %v49, %v215
  %v217 = vpop.f32.mrf.mxu0
  %218 = vdwg.mxu0
  %vm219 = vcmask 261120
  %220 = vst.msk [vmem:[%s6] sm:$0xff] %vm219, %v157
  %221 = vst.msk [vmem:[%s6 + $0x8] sm:$0xff] %vm219, %v160
  %222 = vst.msk [vmem:[%s6 + $0x10] sm:$0xff] %vm219, %v165
  %223 = vst.msk [vmem:[%s6 + $0x18] sm:$0xff] %vm219, %v168
  %224 = vst.msk [vmem:[%s6 + $0x20] sm:$0xff] %vm219, %v173
  %225 = vst.msk [vmem:[%s6 + $0x28] sm:$0xff] %vm219, %v176
  %226 = vst.msk [vmem:[%s6 + $0x30] sm:$0xff] %vm219, %v181
  %227 = vst.msk [vmem:[%s6 + $0x38] sm:$0xff] %vm219, %v184
  %228 = vst.msk [vmem:[%s6 + $0x40] sm:$0xff] %vm219, %v189
  %229 = vst.msk [vmem:[%s6 + $0x48] sm:$0xff] %vm219, %v192
  %230 = vst.msk [vmem:[%s6 + $0x50] sm:$0xff] %vm219, %v197
  %231 = vst.msk [vmem:[%s6 + $0x58] sm:$0xff] %vm219, %v200
  %232 = vst.msk [vmem:[%s6 + $0x60] sm:$0xff] %vm219, %v205
  %233 = vst.msk [vmem:[%s6 + $0x68] sm:$0xff] %vm219, %v208
  %234 = vst.msk [vmem:[%s6 + $0x70] sm:$0xff] %vm219, %v213
  %235 = vst.msk [vmem:[%s6 + $0x78] sm:$0xff] %vm219, %v216
  %v236 = vpack.c.bf16 %v160, %v157
  %v237 = vpack.c.bf16 %v168, %v165
  %v238 = vpack.c.bf16 %v176, %v173
  %v239 = vpack.c.bf16 %v184, %v181
  %v240 = vpack.c.bf16 %v192, %v189
  %v241 = vpack.c.bf16 %v200, %v197
  %v242 = vpack.c.bf16 %v208, %v205
  %v243 = vpack.c.bf16 %v216, %v213
  %v244 = vld [vmem:[%s3] sm:$0xf]
  %v245 = vld [vmem:[%s3 + $0x4] sm:$0xf]
  %v246 = vld [vmem:[%s3 + $0x8] sm:$0xf]
  %v247 = vld [vmem:[%s3 + $0xc] sm:$0xf]
  %v248 = vld [vmem:[%s4] sm:$0x1]
  %v250 = vlaneseq
  %v251 = vshrl.u32 %v250, 7
  %v252 = vsub.s32 0, %v251
  %v253 = vrot.slane %v248, %v252
  %v259 = vunpack.c.l.b16 %v244
  %v260 = vunpack.c.l.b16 %v245
  %v261 = vunpack.c.l.b16 %v246
  %v262 = vunpack.c.l.b16 %v247
  %v263 = vpack.c.b16 %v260, %v259
  %v264 = vpack.c.b16 %v262, %v261
  %v268 = vsel %vm219, %v236, 0
  %v271 = vsel %vm219, %v237, 0
  %v274 = vsel %vm219, %v238, 0
  %v277 = vsel %vm219, %v239, 0
  %v280 = vsel %vm219, %v240, 0
  %v283 = vsel %vm219, %v241, 0
  %v286 = vsel %vm219, %v242, 0
  %v289 = vsel %vm219, %v243, 0
  %291 = vmatprep.subr.bf16.mxu0 0
  %292 = vmatpush1.bf16.msra.mxu0 0
  %293 = vmatprep.subr.bf16.mxu0 0
  %294 = vmatpush1.bf16.msra.mxu0 0
  %295 = vmatprep.subr.bf16.mxu0 0
  %296 = vmatpush1.bf16.msra.mxu0 0
  %297 = vmatprep.subr.bf16.mxu0 0
  %298 = vmatpush1.bf16.msra.mxu0 0
  %299 = vmatprep.subr.bf16.mxu0 0
  %300 = vmatpush1.bf16.msra.mxu0 0
  %301 = vmatprep.subr.bf16.mxu0 0
  %302 = vmatpush1.bf16.msra.mxu0 0
  %303 = vmatprep.subr.bf16.mxu0 0
  %304 = vmatpush1.bf16.msra.mxu0 %v264
  %305 = vmatprep.subr.bf16.mxu0 0
  %306 = vmatpush1.bf16.msra.mxu0 %v263
  %307 = vmatprep.subr.bf16.mxu0 0
  %308 = vmatpush2.bf16.msra.mxu0 0
  %309 = vmatprep.subr.bf16.mxu0 0
  %310 = vmatpush2.bf16.msra.mxu0 0
  %311 = vmatprep.subr.bf16.mxu0 0
  %312 = vmatpush2.bf16.msra.mxu0 0
  %313 = vmatprep.subr.bf16.mxu0 0
  %314 = vmatpush2.bf16.msra.mxu0 0
  %315 = vmatprep.subr.bf16.mxu0 0
  %316 = vmatpush2.bf16.msra.mxu0 0
  %317 = vmatprep.subr.bf16.mxu0 0
  %318 = vmatpush2.bf16.msra.mxu0 0
  %319 = vmatprep.subr.bf16.mxu0 0
  %320 = vmatpush2.bf16.msra.mxu0 0
  %321 = vmatprep.subr.bf16.mxu0 0
  %322 = vmatpush2.bf16.msra.mxu0 0
  %323 = vmatprep.mubr.bf16.mxu0 0
  %324 = vmatmul.mubr.bf16.gmra.mxu0 %v268
  %v325 = vpop.f32.mrf.mxu0
  %v326 = vadd.f32 %v253, %v325
  %v327 = vpop.f32.mrf.mxu0
  %v328 = vpop.f32.mrf.mxu0
  %v329 = vadd.f32 %v253, %v328
  %v330 = vpop.f32.mrf.mxu0
  %331 = vmatprep.mubr.bf16.mxu0 0
  %332 = vmatmul.mubr.bf16.gmra.mxu0 %v271
  %v333 = vpop.f32.mrf.mxu0
  %v334 = vadd.f32 %v253, %v333
  %v335 = vpop.f32.mrf.mxu0
  %v336 = vpop.f32.mrf.mxu0
  %v337 = vadd.f32 %v253, %v336
  %v338 = vpop.f32.mrf.mxu0
  %339 = vmatprep.mubr.bf16.mxu0 0
  %340 = vmatmul.mubr.bf16.gmra.mxu0 %v274
  %v341 = vpop.f32.mrf.mxu0
  %v342 = vadd.f32 %v253, %v341
  %v343 = vpop.f32.mrf.mxu0
  %v344 = vpop.f32.mrf.mxu0
  %v345 = vadd.f32 %v253, %v344
  %v346 = vpop.f32.mrf.mxu0
  %347 = vmatprep.mubr.bf16.mxu0 0
  %348 = vmatmul.mubr.bf16.gmra.mxu0 %v277
  %v349 = vpop.f32.mrf.mxu0
  %v350 = vadd.f32 %v253, %v349
  %v351 = vpop.f32.mrf.mxu0
  %v352 = vpop.f32.mrf.mxu0
  %v353 = vadd.f32 %v253, %v352
  %v354 = vpop.f32.mrf.mxu0
  %355 = vmatprep.mubr.bf16.mxu0 0
  %356 = vmatmul.mubr.bf16.gmra.mxu0 %v280
  %v357 = vpop.f32.mrf.mxu0
  %v358 = vadd.f32 %v253, %v357
  %v359 = vpop.f32.mrf.mxu0
  %v360 = vpop.f32.mrf.mxu0
  %v361 = vadd.f32 %v253, %v360
  %v362 = vpop.f32.mrf.mxu0
  %363 = vmatprep.mubr.bf16.mxu0 0
  %364 = vmatmul.mubr.bf16.gmra.mxu0 %v283
  %v365 = vpop.f32.mrf.mxu0
  %v366 = vadd.f32 %v253, %v365
  %v367 = vpop.f32.mrf.mxu0
  %v368 = vpop.f32.mrf.mxu0
  %v369 = vadd.f32 %v253, %v368
  %v370 = vpop.f32.mrf.mxu0
  %371 = vmatprep.mubr.bf16.mxu0 0
  %372 = vmatmul.mubr.bf16.gmra.mxu0 %v286
  %v373 = vpop.f32.mrf.mxu0
  %v374 = vadd.f32 %v253, %v373
  %v375 = vpop.f32.mrf.mxu0
  %v376 = vpop.f32.mrf.mxu0
  %v377 = vadd.f32 %v253, %v376
  %v378 = vpop.f32.mrf.mxu0
  %379 = vmatprep.mubr.bf16.mxu0 0
  %380 = vmatmul.mubr.bf16.gmra.mxu0 %v289
  %v381 = vpop.f32.mrf.mxu0
  %v382 = vadd.f32 %v253, %v381
  %v383 = vpop.f32.mrf.mxu0
  %v384 = vpop.f32.mrf.mxu0
  %v385 = vadd.f32 %v253, %v384
  %v386 = vpop.f32.mrf.mxu0
  %387 = vdwg.mxu0
  %v388 = vld [vmem:[%s5] sm:$0x1]
  %v390 = vlaneseq
  %v391 = vshrl.u32 %v390, 7
  %v392 = vsub.s32 0, %v391
  %v393 = vrot.slane %v388, %v392
  %v395 = vadd.f32 %v393, 0.0
  %vm396 = vcmp.gt.f32.partialorder %v395, 0.5
  %v397 = vxor.u32 %v326, 2147483648
  %v398 = vxor.u32 %v329, 2147483648
  %v399 = vxor.u32 %v334, 2147483648
  %v400 = vxor.u32 %v337, 2147483648
  %v401 = vxor.u32 %v342, 2147483648
  %v402 = vxor.u32 %v345, 2147483648
  %v403 = vxor.u32 %v350, 2147483648
  %v404 = vxor.u32 %v353, 2147483648
  %v405 = vxor.u32 %v358, 2147483648
  %v406 = vxor.u32 %v361, 2147483648
  %v407 = vxor.u32 %v366, 2147483648
  %v408 = vxor.u32 %v369, 2147483648
  %v409 = vxor.u32 %v374, 2147483648
  %v410 = vxor.u32 %v377, 2147483648
  %v411 = vxor.u32 %v382, 2147483648
  %v412 = vxor.u32 %v385, 2147483648
  %v413 = vmul.f32 %v397, 1.442695
  %v414 = vpow.pop %v413
  %v415 = vmul.f32 %v398, 1.442695
  %v416 = vpow.pop %v415
  %v417 = vmul.f32 %v399, 1.442695
  %v418 = vpow.pop %v417
  %v419 = vmul.f32 %v400, 1.442695
  %v420 = vpow.pop %v419
  %v421 = vmul.f32 %v401, 1.442695
  %v422 = vpow.pop %v421
  %v423 = vmul.f32 %v402, 1.442695
  %v424 = vpow.pop %v423
  %v425 = vmul.f32 %v403, 1.442695
  %v426 = vpow.pop %v425
  %v427 = vmul.f32 %v404, 1.442695
  %v428 = vpow.pop %v427
  %v429 = vmul.f32 %v405, 1.442695
  %v430 = vpow.pop %v429
  %v431 = vmul.f32 %v406, 1.442695
  %v432 = vpow.pop %v431
  %v433 = vmul.f32 %v407, 1.442695
  %v434 = vpow.pop %v433
  %v435 = vmul.f32 %v408, 1.442695
  %v436 = vpow.pop %v435
  %v437 = vmul.f32 %v409, 1.442695
  %v438 = vpow.pop %v437
  %v439 = vmul.f32 %v410, 1.442695
  %v440 = vpow.pop %v439
  %v441 = vmul.f32 %v411, 1.442695
  %v442 = vpow.pop %v441
  %v443 = vmul.f32 %v412, 1.442695
  %v444 = vpow.pop %v443
  %v445 = vadd.f32 %v414, 1.0
  %v446 = vadd.f32 %v416, 1.0
  %v447 = vadd.f32 %v418, 1.0
  %v448 = vadd.f32 %v420, 1.0
  %v449 = vadd.f32 %v422, 1.0
  %v450 = vadd.f32 %v424, 1.0
  %v451 = vadd.f32 %v426, 1.0
  %v452 = vadd.f32 %v428, 1.0
  %v453 = vadd.f32 %v430, 1.0
  %v454 = vadd.f32 %v432, 1.0
  %v455 = vadd.f32 %v434, 1.0
  %v456 = vadd.f32 %v436, 1.0
  %v457 = vadd.f32 %v438, 1.0
  %v458 = vadd.f32 %v440, 1.0
  %v459 = vadd.f32 %v442, 1.0
  %v460 = vadd.f32 %v444, 1.0
  %v461 = vrcp.pop %v445
  %v462 = vmul.f32 1.0, %v461
  %v463 = vrcp.pop %v446
  %v464 = vmul.f32 1.0, %v463
  %v465 = vrcp.pop %v447
  %v466 = vmul.f32 1.0, %v465
  %v467 = vrcp.pop %v448
  %v468 = vmul.f32 1.0, %v467
  %v469 = vrcp.pop %v449
  %v470 = vmul.f32 1.0, %v469
  %v471 = vrcp.pop %v450
  %v472 = vmul.f32 1.0, %v471
  %v473 = vrcp.pop %v451
  %v474 = vmul.f32 1.0, %v473
  %v475 = vrcp.pop %v452
  %v476 = vmul.f32 1.0, %v475
  %v477 = vrcp.pop %v453
  %v478 = vmul.f32 1.0, %v477
  %v479 = vrcp.pop %v454
  %v480 = vmul.f32 1.0, %v479
  %v481 = vrcp.pop %v455
  %v482 = vmul.f32 1.0, %v481
  %v483 = vrcp.pop %v456
  %v484 = vmul.f32 1.0, %v483
  %v485 = vrcp.pop %v457
  %v486 = vmul.f32 1.0, %v485
  %v487 = vrcp.pop %v458
  %v488 = vmul.f32 1.0, %v487
  %v489 = vrcp.pop %v459
  %v490 = vmul.f32 1.0, %v489
  %v491 = vrcp.pop %v460
  %v492 = vmul.f32 1.0, %v491
  %v493 = vsel %vm396, %v462, %v326
  %v494 = vsel %vm396, %v464, %v329
  %v495 = vsel %vm396, %v466, %v334
  %v496 = vsel %vm396, %v468, %v337
  %v497 = vsel %vm396, %v470, %v342
  %v498 = vsel %vm396, %v472, %v345
  %v499 = vsel %vm396, %v474, %v350
  %v500 = vsel %vm396, %v476, %v353
  %v501 = vsel %vm396, %v478, %v358
  %v502 = vsel %vm396, %v480, %v361
  %v503 = vsel %vm396, %v482, %v366
  %v504 = vsel %vm396, %v484, %v369
  %v505 = vsel %vm396, %v486, %v374
  %v506 = vsel %vm396, %v488, %v377
  %v507 = vsel %vm396, %v490, %v382
  %v508 = vsel %vm396, %v492, %v385
  %509 = vst [vmem:[%s7] sm:$0xff] %v493
  %510 = vst [vmem:[%s7 + $0x8] sm:$0xff] %v494
  %511 = vst [vmem:[%s7 + $0x10] sm:$0xff] %v495
  %512 = vst [vmem:[%s7 + $0x18] sm:$0xff] %v496
  %513 = vst [vmem:[%s7 + $0x20] sm:$0xff] %v497
  %514 = vst [vmem:[%s7 + $0x28] sm:$0xff] %v498
  %515 = vst [vmem:[%s7 + $0x30] sm:$0xff] %v499
  %516 = vst [vmem:[%s7 + $0x38] sm:$0xff] %v500
  %517 = vst [vmem:[%s7 + $0x40] sm:$0xff] %v501
  %518 = vst [vmem:[%s7 + $0x48] sm:$0xff] %v502
  %519 = vst [vmem:[%s7 + $0x50] sm:$0xff] %v503
  %520 = vst [vmem:[%s7 + $0x58] sm:$0xff] %v504
  %521 = vst [vmem:[%s7 + $0x60] sm:$0xff] %v505
  %522 = vst [vmem:[%s7 + $0x68] sm:$0xff] %v506
  %523 = vst [vmem:[%s7 + $0x70] sm:$0xff] %v507
  %524 = vst [vmem:[%s7 + $0x78] sm:$0xff] %v508
  // Predicated region
  $region26: #{forward.4} parent=0 // pred_check
    _
  $region27: #{forward.4} parent=0 // pred_check_branch
    %526 = sbr.rel (0) target = $region29
  $region28: #{forward.4} parent=0 // pred_region
    _
  $region29: #{forward.4} parent=0 // pred_fallthru
    _
  // Predicated region
  $region30: #{forward.4} parent=0 // pred_check
    _
  $region31: #{forward.4} parent=0 // pred_check_branch
    %528 = sbr.rel (0) target = $region33
  $region32: #{forward.4} parent=0 // pred_region
    _
  $region33: #{forward.4} parent=0 // pred_fallthru
    _
  // Predicated region
  $region34: #{forward.4} parent=0 // pred_check
    _
  $region35: #{forward.4} parent=0 // pred_check_branch
    %530 = sbr.rel (0) target = $region37
  $region36: #{forward.4} parent=0 // pred_region
    _
  $region37: #{forward.4} parent=0 // pred_fallthru
    _
  // Predicated region
  $region38: #{forward.4} parent=0 // pred_check
    _
  $region39: #{forward.4} parent=0 // pred_check_branch
    %532 = sbr.rel (0) target = $region41
  $region40: #{forward.4} parent=0 // pred_region
    _
  $region41: #{forward.4} parent=0 // pred_fallthru
    _

// kernel: forward.5
$region0: #{forward.5}
  #allocation0 [shape = 'u32[]', space=smem, size = 0x4, offset = 0x4, fixed_abs, tag = 'smem constant byte address 0x4 - core index']
  #allocation1 [shape = 'u32[144,128]{1,0:T(1,128)}', space=vmem, size = 0x12000, scoped, tag = 'internal scratch']
  %s0 = inlined_call_operand.vmem [shape: bf16[32,32], index: 0, kind: input, shape index: {}]
  %s1 = inlined_call_operand.vmem [shape: bf16[32,64], index: 1, kind: input, shape index: {}]
  %s2 = inlined_call_operand.vmem [shape: f32[1,64], index: 2, kind: input, shape index: {}]
  %s3 = inlined_call_operand.vmem [shape: bf16[64,128], index: 3, kind: input, shape index: {}]
  %s4 = inlined_call_operand.vmem [shape: f32[1,128], index: 4, kind: input, shape index: {}]
  %s5 = inlined_call_operand.vmem [shape: f32[1,128], index: 5, kind: input, shape index: {}]
  %s6 = inlined_call_operand.hbm [shape: f32[32,64], index: 6, kind: output, shape index: {0}]
  %s7 = inlined_call_operand.vmem [shape: f32[32,128], index: 7, kind: output, shape index: {1}]
  %8 = xla_tuple %s6, %s7
  %s9 = sld [smem:[#allocation0]]
  $region42: #{forward.5} parent=0
    _
  %s11 = ssub.s32 1, %s9
  %s12 = scalar_select 0, %s11, %s9
  $region1: #{forward.5} parent=0
    #allocation2 [shape = 'u8[16384]{0}', space=vmem, size = 0x4000, scoped, tag = 'output window, operand 0, single buffered']
    #allocation3 [shape = 's32[1]{0}', space=sflag, size = 0x4, scoped, tag = 'scoped memory for forward.5']
    %13 = vsyncpa [#allocation3], 0
    // Predicated region
    $region2: #{forward.5} parent=1 // pred_check
      _
    $region3: #{forward.5} parent=1 // pred_check_branch
      %15 = sbr.rel (0) target = $region5
    $region4: #{forward.5} parent=1 // pred_region
      _
    $region5: #{forward.5} parent=1 // pred_fallthru
      _
    // Predicated region
    $region6: #{forward.5} parent=1 // pred_check
      _
    $region7: #{forward.5} parent=1 // pred_check_branch
      %17 = sbr.rel (0) target = $region9
    $region8: #{forward.5} parent=1 // pred_region
      _
    $region9: #{forward.5} parent=1 // pred_fallthru
      _
    // Predicated region
    $region10: #{forward.5} parent=1 // pred_check
      _
    $region11: #{forward.5} parent=1 // pred_check_branch
      %19 = sbr.rel (0) target = $region13
    $region12: #{forward.5} parent=1 // pred_region
      _
    $region13: #{forward.5} parent=1 // pred_fallthru
      _
    // Predicated region
    $region14: #{forward.5} parent=1 // pred_check
      _
    $region15: #{forward.5} parent=1 // pred_check_branch
      %21 = sbr.rel (0) target = $region17
    $region16: #{forward.5} parent=1 // pred_region
      _
    $region17: #{forward.5} parent=1 // pred_fallthru
      _
    // Predicated region
    $region18: #{forward.5} parent=1 // pred_check
      _
    $region19: #{forward.5} parent=1 // pred_check_branch
      %23 = sbr.rel (0) target = $region21
    $region20: #{forward.5} parent=1 // pred_region
      _
    $region21: #{forward.5} parent=1 // pred_fallthru
      _
    // Predicated region
    $region22: #{forward.5} parent=1 // pred_check
      _
    $region23: #{forward.5} parent=1 // pred_check_branch
      %25 = sbr.rel (0) target = $region25
    $region24: #{forward.5} parent=1 // pred_region
      _
    $region25: #{forward.5} parent=1 // pred_fallthru
      _
    %v27 = vld [vmem:[%s0] sm:$0xf]
    %v28 = vld [vmem:[%s0 + $0x4] sm:$0xf]
    %v29 = vld [vmem:[%s0 + $0x8] sm:$0xf]
    %v30 = vld [vmem:[%s0 + $0xc] sm:$0xf]
    %v31 = vld [vmem:[%s1] sm:$0xf]
    %v32 = vld [vmem:[%s1 + $0x4] sm:$0xf]
    %v33 = vld [vmem:[%s1 + $0x8] sm:$0xf]
    %v34 = vld [vmem:[%s1 + $0xc] sm:$0xf]
    %v35 = vld [vmem:[%s2] sm:$0x1]
    %v37 = vlaneseq
    %v38 = vshrl.u32 %v37, 7
    %v39 = vsub.s32 0, %v38
    %v40 = vrot.slane %v35, %v39
    %v46 = vunpack.c.l.b16 %v27
    %v47 = vunpack.c.l.b16 %v28
    %v48 = vunpack.c.l.b16 %v29
    %v49 = vunpack.c.l.b16 %v30
    %v50 = vpack.c.b16 %v47, %v46
    %v51 = vpack.c.b16 %v49, %v48
    %v56 = vunpack.c.l.b16 %v31
    %v57 = vunpack.c.l.b16 %v32
    %v58 = vunpack.c.l.b16 %v33
    %v59 = vunpack.c.l.b16 %v34
    %v60 = vpack.c.b16 %v57, %v56
    %v61 = vpack.c.b16 %v59, %v58
    %vm64 = vcmask 261120
    %v66 = vsel %vm64, %v50, 0
    %v69 = vsel %vm64, %v51, 0
    %71 = vmatprep.subr.bf16.mxu0 0
    %72 = vmatpush1.bf16.msra.mxu0 0
    %73 = vmatprep.subr.bf16.mxu0 0
    %74 = vmatpush1.bf16.msra.mxu0 0
    %75 = vmatprep.subr.bf16.mxu0 0
    %76 = vmatpush1.bf16.msra.mxu0 0
    %77 = vmatprep.subr.bf16.mxu0 0
    %78 = vmatpush1.bf16.msra.mxu0 0
    %79 = vmatprep.subr.bf16.mxu0 0
    %80 = vmatpush1.bf16.msra.mxu0 0
    %81 = vmatprep.subr.bf16.mxu0 0
    %82 = vmatpush1.bf16.msra.mxu0 0
    %83 = vmatprep.subr.bf16.mxu0 0
    %84 = vmatpush1.bf16.msra.mxu0 %v61
    %85 = vmatprep.subr.bf16.mxu0 0
    %86 = vmatpush1.bf16.msra.mxu0 %v60
    %87 = vmatprep.subr.bf16.mxu0 0
    %88 = vmatpush2.bf16.msra.mxu0 0
    %89 = vmatprep.subr.bf16.mxu0 0
    %90 = vmatpush2.bf16.msra.mxu0 0
    %91 = vmatprep.subr.bf16.mxu0 0
    %92 = vmatpush2.bf16.msra.mxu0 0
    %93 = vmatprep.subr.bf16.mxu0 0
    %94 = vmatpush2.bf16.msra.mxu0 0
    %95 = vmatprep.subr.bf16.mxu0 0
    %96 = vmatpush2.bf16.msra.mxu0 0
    %97 = vmatprep.subr.bf16.mxu0 0
    %98 = vmatpush2.bf16.msra.mxu0 0
    %99 = vmatprep.subr.bf16.mxu0 0
    %100 = vmatpush2.bf16.msra.mxu0 0
    %101 = vmatprep.subr.bf16.mxu0 0
    %102 = vmatpush2.bf16.msra.mxu0 0
    %103 = vmatprep.mubr.bf16.mxu0 0
    %104 = vmatmul.mubr.bf16.gmra.mxu0 %v66
    %v105 = vpop.f32.mrf.mxu0
    %v106 = vadd.f32 %v40, %v105
    %v107 = vpop.f32.mrf.mxu0
    %v108 = vpop.f32.mrf.mxu0
    %v109 = vadd.f32 %v40, %v108
    %v110 = vpop.f32.mrf.mxu0
    %111 = vmatprep.mubr.bf16.mxu0 0
    %112 = vmatmul.mubr.bf16.gmra.mxu0 %v69
    %v113 = vpop.f32.mrf.mxu0
    %v114 = vadd.f32 %v40, %v113
    %v115 = vpop.f32.mrf.mxu0
    %v116 = vpop.f32.mrf.mxu0
    %v117 = vadd.f32 %v40, %v116
    %v118 = vpop.f32.mrf.mxu0
    %119 = vdwg.mxu0
    %vm120 = vcmask 523264
    %121 = vst.msk [vmem:[#allocation2] sm:$0xff] %vm120, %v106
    %122 = vst.msk [vmem:[#allocation2 + $0x8] sm:$0xff] %vm120, %v109
    %123 = vst.msk [vmem:[#allocation2 + $0x10] sm:$0xff] %vm120, %v114
    %124 = vst.msk [vmem:[#allocation2 + $0x18] sm:$0xff] %vm120, %v117
    %v125 = vpack.c.bf16 %v109, %v106
    %v126 = vpack.c.bf16 %v117, %v114
    %v127 = vld [vmem:[%s3] sm:$0xf]
    %v128 = vld [vmem:[%s3 + $0x4] sm:$0xf]
    %v129 = vld [vmem:[%s3 + $0x8] sm:$0xf]
    %v130 = vld [vmem:[%s3 + $0xc] sm:$0xf]
    %v131 = vld [vmem:[%s3 + $0x10] sm:$0xf]
    %v132 = vld [vmem:[%s3 + $0x14] sm:$0xf]
    %v133 = vld [vmem:[%s3 + $0x18] sm:$0xf]
    %v134 = vld [vmem:[%s3 + $0x1c] sm:$0xf]
    %v135 = vld [vmem:[%s4] sm:$0x1]
    %v137 = vlaneseq
    %v138 = vshrl.u32 %v137, 7
    %v139 = vsub.s32 0, %v138
    %v140 = vrot.slane %v135, %v139
    %v150 = vunpack.c.l.b16 %v127
    %v151 = vunpack.c.l.b16 %v128
    %v152 = vunpack.c.l.b16 %v129
    %v153 = vunpack.c.l.b16 %v130
    %v154 = vunpack.c.l.b16 %v131
    %v155 = vunpack.c.l.b16 %v132
    %v156 = vunpack.c.l.b16 %v133
    %v157 = vunpack.c.l.b16 %v134
    %v158 = vpack.c.b16 %v151, %v150
    %v159 = vpack.c.b16 %v153, %v152
    %v160 = vpack.c.b16 %v155, %v154
    %v161 = vpack.c.b16 %v157, %v156
    %v167 = vsel %vm120, %v125, 0
    %v170 = vsel %vm120, %v126, 0
    %172 = vmatprep.subr.bf16.mxu0 0
    %173 = vmatpush1.bf16.msra.mxu0 0
    %174 = vmatprep.subr.bf16.mxu0 0
    %175 = vmatpush1.bf16.msra.mxu0 0
    %176 = vmatprep.subr.bf16.mxu0 0
    %177 = vmatpush1.bf16.msra.mxu0 0
    %178 = vmatprep.subr.bf16.mxu0 0
    %179 = vmatpush1.bf16.msra.mxu0 0
    %180 = vmatprep.subr.bf16.mxu0 0
    %181 = vmatpush1.bf16.msra.mxu0 %v161
    %182 = vmatprep.subr.bf16.mxu0 0
    %183 = vmatpush1.bf16.msra.mxu0 %v160
    %184 = vmatprep.subr.bf16.mxu0 0
    %185 = vmatpush1.bf16.msra.mxu0 %v159
    %186 = vmatprep.subr.bf16.mxu0 0
    %187 = vmatpush1.bf16.msra.mxu0 %v158
    %188 = vmatprep.subr.bf16.mxu0 0
    %189 = vmatpush2.bf16.msra.mxu0 0
    %190 = vmatprep.subr.bf16.mxu0 0
    %191 = vmatpush2.bf16.msra.mxu0 0
    %192 = vmatprep.subr.bf16.mxu0 0
    %193 = vmatpush2.bf16.msra.mxu0 0
    %194 = vmatprep.subr.bf16.mxu0 0
    %195 = vmatpush2.bf16.msra.mxu0 0
    %196 = vmatprep.subr.bf16.mxu0 0
    %197 = vmatpush2.bf16.msra.mxu0 0
    %198 = vmatprep.subr.bf16.mxu0 0
    %199 = vmatpush2.bf16.msra.mxu0 0
    %200 = vmatprep.subr.bf16.mxu0 0
    %201 = vmatpush2.bf16.msra.mxu0 0
    %202 = vmatprep.subr.bf16.mxu0 0
    %203 = vmatpush2.bf16.msra.mxu0 0
    %204 = vmatprep.mubr.bf16.mxu0 0
    %205 = vmatmul.mubr.bf16.gmra.mxu0 %v167
    %v206 = vpop.f32.mrf.mxu0
    %v207 = vadd.f32 %v140, %v206
    %v208 = vpop.f32.mrf.mxu0
    %v209 = vpop.f32.mrf.mxu0
    %v210 = vadd.f32 %v140, %v209
    %v211 = vpop.f32.mrf.mxu0
    %212 = vmatprep.mubr.bf16.mxu0 0
    %213 = vmatmul.mubr.bf16.gmra.mxu0 %v170
    %v214 = vpop.f32.mrf.mxu0
    %v215 = vadd.f32 %v140, %v214
    %v216 = vpop.f32.mrf.mxu0
    %v217 = vpop.f32.mrf.mxu0
    %v218 = vadd.f32 %v140, %v217
    %v219 = vpop.f32.mrf.mxu0
    %220 = vdwg.mxu0
    %v221 = vld [vmem:[%s5] sm:$0x1]
    %v223 = vlaneseq
    %v224 = vshrl.u32 %v223, 7
    %v225 = vsub.s32 0, %v224
    %v226 = vrot.slane %v221, %v225
    %v228 = vadd.f32 %v226, 0.0
    %vm229 = vcmp.gt.f32.partialorder %v228, 0.5
    %v230 = vxor.u32 %v207, 2147483648
    %v231 = vxor.u32 %v210, 2147483648
    %v232 = vxor.u32 %v215, 2147483648
    %v233 = vxor.u32 %v218, 2147483648
    %v234 = vmul.f32 %v230, 1.442695
    %v235 = vpow.pop %v234
    %v236 = vmul.f32 %v231, 1.442695
    %v237 = vpow.pop %v236
    %v238 = vmul.f32 %v232, 1.442695
    %v239 = vpow.pop %v238
    %v240 = vmul.f32 %v233, 1.442695
    %v241 = vpow.pop %v240
    %v242 = vadd.f32 %v235, 1.0
    %v243 = vadd.f32 %v237, 1.0
    %v244 = vadd.f32 %v239, 1.0
    %v245 = vadd.f32 %v241, 1.0
    %v246 = vrcp.pop %v242
    %v247 = vmul.f32 1.0, %v246
    %v248 = vrcp.pop %v243
    %v249 = vmul.f32 1.0, %v248
    %v250 = vrcp.pop %v244
    %v251 = vmul.f32 1.0, %v250
    %v252 = vrcp.pop %v245
    %v253 = vmul.f32 1.0, %v252
    %v254 = vsel %vm229, %v247, %v207
    %v255 = vsel %vm229, %v249, %v210
    %v256 = vsel %vm229, %v251, %v215
    %v257 = vsel %vm229, %v253, %v218
    %258 = vst [vmem:[%s7] sm:$0xff] %v254
    %259 = vst [vmem:[%s7 + $0x8] sm:$0xff] %v255
    %260 = vst [vmem:[%s7 + $0x10] sm:$0xff] %v256
    %261 = vst [vmem:[%s7 + $0x18] sm:$0xff] %v257
    // Predicated region
    $region26: #{forward.5} parent=1 // pred_check
      _
    $region27: #{forward.5} parent=1 // pred_check_branch
      %263 = sbr.rel (0) target = $region29
    $region28: #{forward.5} parent=1 // pred_region
      %s265 = ssub.s32 512, 512
      %266 = vsyncadd [#allocation3], %s265
      %s267 = sshll.u32 [#allocation2], 4
      %s268 = int_to_ptr.vmem [resolvable:$true] %s267
      %273 = dma.vmem_to_hbm [thread:$0]  %s268, 512, %s6, [#allocation3], 128, 128, 8
    $region29: #{forward.5} parent=1 // pred_fallthru
      _
    // Predicated region
    $region30: #{forward.5} parent=1 // pred_check
      _
    $region31: #{forward.5} parent=1 // pred_check_branch
      %275 = sbr.rel (0) target = $region33
    $region32: #{forward.5} parent=1 // pred_region
      _
    $region33: #{forward.5} parent=1 // pred_fallthru
      _
    // Predicated region
    $region34: #{forward.5} parent=1 // pred_check
      _
    $region35: #{forward.5} parent=1 // pred_check_branch
      %277 = sbr.rel (0) target = $region37
    $region36: #{forward.5} parent=1 // pred_region
      %278 = dma.done [#allocation3], 512
    $region37: #{forward.5} parent=1 // pred_fallthru
      _
    // Predicated region
    $region38: #{forward.5} parent=1 // pred_check
      _
    $region39: #{forward.5} parent=1 // pred_check_branch
      %280 = sbr.rel (0) target = $region41
    $region40: #{forward.5} parent=1 // pred_region
      _
    $region41: #{forward.5} parent=1 // pred_fallthru
      _
    %281 = vsyncpa [#allocation3], 1

</llo_original>
